<compile_context>
chip_gen: v5e
topology: v5e:2x2
jax: 0.10.0
libtpu: 0.0.40
codegen_flags: <defaults>
</compile_context>

<pallas_src>
import functools

import jax
import jax.numpy as jnp
from jax import lax
from jax.experimental import pallas as pl
from jax.experimental.pallas import tpu as pltpu

_HP = lax.Precision.HIGHEST


def _round_up(x: int, m: int) -> int:
    return ((x + m - 1) // m) * m


def _recip_newton(x):
    """EUP approximate reciprocal + one Newton step (~f32 accurate, VALU-cheap)."""
    r = pl.reciprocal(x, approx=True)
    return r * (2.0 - x * r)


def _bezier_kernel(feat_ref, cp_ref, w_ref, lw_ref, lb_ref, cum_ref,
                   dp_ref, pv_ref, intvls_ref, *,
                   n_control_points, coord_dim, lane_chunk):
    c = n_control_points
    p = cum_ref.shape[0]            # n_data_points
    tile = feat_ref.shape[0]        # batch lanes in this block

    # Tiny per-call constants: read once, reused across lane chunks.
    lw = lw_ref[...]                # (Q, F)  Q = n_data_points-1 rounded up to sublanes
    lb = lb_ref[...]                # (Q, 1)  padded rows carry -1e30 -> softmax ~ 0
    cum = cum_ref[...]              # (P, Q)  0/1 inclusive-cumsum matrix (pad cols = 0)

    # Static lane-chunk loop keeps the working set inside the vreg file while the
    # BlockSpec tile stays big (amortizes the ~0.35us per-grid-step overhead).
    for j0 in range(0, tile, lane_chunk):
        cw = min(lane_chunk, tile - j0)
        sl = slice(j0, j0 + cw)

        # ---- intervals: Linear -> Softmax(dim=1), batch-last (lanes = batch) ----
        feat = feat_ref[sl, :]                                    # (cw, F) natural layout
        logits = lax.dot_general(                                  # (Q, cw) = lw @ feat^T
            lw, feat, (((1,), (1,)), ((), ())),
            preferred_element_type=jnp.float32, precision=_HP) + lb
        m = jnp.max(logits, axis=0, keepdims=True)
        e = jnp.exp(logits - m)
        inv_sum = pl.reciprocal(jnp.sum(e, axis=0, keepdims=True), approx=False)
        sm = e * inv_sum                                           # (Q, cw)

        # ---- ConstantPad1d((1, 0), 0): intvls = [0 ; sm]  (shifted store, no matmul) ----
        intvls_ref[:, sl] = jnp.concatenate(
            [jnp.zeros((1, cw), jnp.float32), sm[:p - 1, :]], axis=0)

        # ---- pv = clip(cumsum(intvls), 0, 1) via hoisted 0/1 matrix (full-f32 matmul) ----
        pv = jnp.clip(jnp.dot(cum, sm, preferred_element_type=jnp.float32,
                              precision=_HP), 0.0, 1.0)           # (P, cw)
        pv_ref[:, sl] = pv

        # ---- Bernstein basis of degree c-1: de Casteljau (pure VPU FMAs, exact) ----
        t = pv
        omt = 1.0 - t
        basis = [jnp.ones_like(t)]                 # degree 0
        for _ in range(c - 2):                     # build degree c-2 (c-1 rows live)
            nxt = [omt * basis[0]]
            for i in range(1, len(basis)):
                nxt.append(t * basis[i - 1] + omt * basis[i])
            nxt.append(t * basis[-1])
            basis = nxt

        # ---- final de Casteljau level fused with the rational accumulation ----
        #   dp[d] = sum_i cp[d,i] w[i] B_i / sum_i w[i] B_i
        w = w_ref[:, sl]                           # (C, cw)
        cp = cp_ref[:, :, sl]                      # (D, C, cw)
        den = jnp.zeros_like(t)
        nums = [jnp.zeros_like(t) for _ in range(coord_dim)]
        for i in range(c):
            if c == 1:
                b_i = basis[0]
            elif i == 0:
                b_i = omt * basis[0]
            elif i == c - 1:
                b_i = t * basis[-1]
            else:
                b_i = t * basis[i - 1] + omt * basis[i]
            wb = w[i:i + 1, :] * b_i               # (1,cw) * (P,cw) broadcast
            den = den + wb
            for d in range(coord_dim):
                nums[d] = nums[d] + cp[d, i:i + 1, :] * wb

        inv_den = _recip_newton(den)               # EUP recip, frees VALU
        for d in range(coord_dim):
            dp_ref[d, :, sl] = nums[d] * inv_den


def bezier_layer(features, control_points, weights, lin_w, lin_b, *,
                 n_control_points, n_data_points, tile_n=1024, lane_chunk=256):
    """BezierLayer.forward.

    features (N,F), control_points (N,D,C), weights (N,1,C),
    lin_w (P-1,F) [torch nn.Linear (out,in) layout], lin_b (P-1,).
    Returns dp (N,D,P), pv (N,1,P), intvls (N,P).
    """
    n, f_dim = features.shape
    _, d_dim, c = control_points.shape
    p = n_data_points
    assert c == n_control_points
    assert weights.shape == (n, 1, c)
    assert lin_w.shape == (p - 1, f_dim) and lin_b.shape == (p - 1,)

    # Batch tiling: lane-dense tile (multiple of 128); >= 2 grid steps whenever N > 128 so
    # v7x megacore can shard the batch across both TensorCores.
    tile_cap = max(128, (int(tile_n) // 128) * 128)
    if n <= 128:
        tile = 128
    else:
        tile = min(tile_cap, _round_up(-(-n // 2), 128))
    grid = -(-n // tile)
    n_pad = grid * tile
    lane_chunk = max(128, (int(lane_chunk) // 128) * 128)

    feat_nat = jnp.asarray(features, jnp.float32)                                  # (N, F)
    cp_t = jnp.transpose(jnp.asarray(control_points, jnp.float32), (1, 2, 0))      # (D, C, N)
    w_t = jnp.asarray(weights, jnp.float32)[:, 0, :].T                             # (C, N)
    if n_pad != n:
        pad = n_pad - n
        feat_nat = jnp.pad(feat_nat, ((0, pad), (0, 0)))
        cp_t = jnp.pad(cp_t, ((0, 0), (0, 0), (0, pad)))
        w_t = jnp.pad(w_t, ((0, 0), (0, pad)), constant_values=1.0)   # keep den > 0 in padding

    # Linear weights sublane-padded to Q rows; padded rows get a -1e30 bias so their
    # softmax contribution underflows to exactly zero.
    q = max(8, _round_up(p - 1, 8))
    lw = jnp.zeros((q, f_dim), jnp.float32).at[:p - 1, :].set(jnp.asarray(lin_w, jnp.float32))
    lb = jnp.full((q, 1), -1e30, jnp.float32).at[:p - 1, 0].set(jnp.asarray(lin_b, jnp.float32))

    # Hoisted 0/1 matrix for the inclusive cumsum: pv_j = sum_{i<j} sm_i (pad columns = 0).
    jj = jnp.arange(p, dtype=jnp.int32)[:, None]
    ii = jnp.arange(q, dtype=jnp.int32)[None, :]
    cum_mat = ((jj >= ii + 1) & (ii < p - 1)).astype(jnp.float32)                  # (P, Q)

    kernel = functools.partial(_bezier_kernel, n_control_points=c,
                               coord_dim=d_dim, lane_chunk=lane_chunk)

    dp_t, pv_t, intvls_t = pl.pallas_call(
        kernel,
        out_shape=(
            jax.ShapeDtypeStruct((d_dim, p, n_pad), jnp.float32),
            jax.ShapeDtypeStruct((p, n_pad), jnp.float32),
            jax.ShapeDtypeStruct((p, n_pad), jnp.float32),
        ),
        grid=(grid,),
        in_specs=[
            pl.BlockSpec((tile, f_dim), lambda b: (b, 0)),        # features, natural layout
            pl.BlockSpec((d_dim, c, tile), lambda b: (0, 0, b)),  # control points, batch-last
            pl.BlockSpec((c, tile), lambda b: (0, b)),            # weights, batch-last
            pl.BlockSpec((q, f_dim), lambda b: (0, 0)),           # Linear weight (resident)
            pl.BlockSpec((q, 1), lambda b: (0, 0)),               # Linear bias (resident)
            pl.BlockSpec((p, q), lambda b: (0, 0)),               # cumsum matrix (resident)
        ],
        out_specs=(
            pl.BlockSpec((d_dim, p, tile), lambda b: (0, 0, b)),
            pl.BlockSpec((p, tile), lambda b: (0, b)),
            pl.BlockSpec((p, tile), lambda b: (0, b)),
        ),
        compiler_params=pltpu.CompilerParams(dimension_semantics=("parallel",)),
    )(feat_nat, cp_t, w_t, lw, lb, cum_mat)

    # PyTorch-layout API: transpose the batch-last kernel outputs back. Callers that can
    # consume batch-last (D,P,N)/(P,N) directly should use dp_t/pv_t/intvls_t and skip these.
    dp = jnp.transpose(dp_t[:, :, :n], (2, 0, 1))   # (N, D, P)
    pv = pv_t[:, :n].T[:, None, :]                  # (N, 1, P)
    intvls = intvls_t[:, :n].T                      # (N, P)
    return dp, pv, intvls


def bezier_layer_ref(features, control_points, weights, lin_w, lin_b, *,
                     n_control_points, n_data_points, eps=1e-7):
    """Pure-JAX reference mirroring the PyTorch semantics (log/exp/lgamma/eps form)."""
    logits = jnp.dot(features, lin_w.T, precision=_HP) + lin_b.reshape(1, -1)
    sm = jax.nn.softmax(logits, axis=1)
    intvls = jnp.pad(sm, ((0, 0), (1, 0)))
    pv = jnp.clip(jnp.cumsum(intvls, axis=-1), 0.0, 1.0)[:, None, :]
    c = n_control_points
    pw1 = jnp.arange(c, dtype=jnp.float32).reshape(1, -1, 1)
    pw2 = jnp.flip(pw1, axis=1)
    lbs = (pw1 * jnp.log(pv + eps) + pw2 * jnp.log(1.0 - pv + eps)
           + lax.lgamma(jnp.float32(c) + eps)
           - lax.lgamma(pw1 + 1.0 + eps) - lax.lgamma(pw2 + 1.0 + eps))
    bs = jnp.exp(lbs)                                                    # (N, C, P)
    num = jnp.einsum('ndc,ncp->ndp', control_points * weights, bs, precision=_HP)
    den = jnp.einsum('nqc,ncp->nqp', weights, bs, precision=_HP)
    dp = num / den
    return dp, pv, intvls


def _check(n, key, lin_w, lin_b, *, f, d, c, p, tile_n=1024):
    k1, k2, k3 = jax.random.split(key, 3)
    features = jax.random.normal(k1, (n, f), dtype=jnp.float32)
    control_points = jax.random.normal(k2, (n, d, c), dtype=jnp.float32)
    weights = jax.random.uniform(k3, (n, 1, c), dtype=jnp.float32, minval=0.1, maxval=1.0)

    dp, pv, intvls = bezier_layer(features, control_points, weights, lin_w, lin_b,
                                  n_control_points=c, n_data_points=p, tile_n=tile_n)
    jax.block_until_ready((dp, pv, intvls))

    dp_r, pv_r, intvls_r = bezier_layer_ref(features, control_points, weights, lin_w, lin_b,
                                            n_control_points=c, n_data_points=p)
    assert dp.shape == (n, d, p) and pv.shape == (n, 1, p) and intvls.shape == (n, p)
    assert jnp.allclose(dp, dp_r, rtol=2e-3, atol=1e-3), \
        f"dp max err {float(jnp.max(jnp.abs(dp - dp_r)))}"
    assert jnp.allclose(pv, pv_r, rtol=1e-3, atol=5e-5), \
        f"pv max err {float(jnp.max(jnp.abs(pv - pv_r)))}"
    assert jnp.allclose(intvls, intvls_r, rtol=1e-3, atol=5e-5), \
        f"intvls max err {float(jnp.max(jnp.abs(intvls - intvls_r)))}"


if __name__ == "__main__":
    # Small shapes consistent with the module's forward.
    N, F, D, C, P = 4, 32, 2, 8, 16   # batch, in_features, coord dim, control pts, data pts

    key = jax.random.PRNGKey(0)
    kw, kb, kd0, kd1, kd2 = jax.random.split(key, 5)
    lin_w = 0.1 * jax.random.normal(kw, (P - 1, F), dtype=jnp.float32)   # torch (out, in) layout
    lin_b = 0.1 * jax.random.normal(kb, (P - 1,), dtype=jnp.float32)

    # Single-block path (N padded to 128 lanes, grid = 1).
    _check(N, kd0, lin_w, lin_b, f=F, d=D, c=C, p=P)

    # Multi-step grid: N=200 -> tile=128, grid=2 (exercises batch padding + megacore split).
    _check(200, kd1, lin_w, lin_b, f=F, d=D, c=C, p=P)

    # Larger batch: N=700 -> tile=384, grid=2; exercises the in-kernel 256+128 lane chunks.
    _check(700, kd2, lin_w, lin_b, f=F, d=D, c=C, p=P)

    print("KERNEL_OK")
</pallas_src>

<mosaic_0001>
module attributes {stable_mosaic.version = 11 : i64} {
  func.func @_bezier_kernel(%arg0: i32, %arg1: memref<128x32xf32, #tpu.memory_space<vmem>>, %arg2: memref<2x8x128xf32, #tpu.memory_space<vmem>>, %arg3: memref<8x128xf32, #tpu.memory_space<vmem>>, %arg4: memref<16x32xf32, #tpu.memory_space<vmem>>, %arg5: memref<16x1xf32, #tpu.memory_space<vmem>>, %arg6: memref<16x16xf32, #tpu.memory_space<vmem>>, %arg7: memref<2x16x128xf32, #tpu.memory_space<vmem>>, %arg8: memref<16x128xf32, #tpu.memory_space<vmem>>, %arg9: memref<16x128xf32, #tpu.memory_space<vmem>>) attributes {dimension_semantics = [#tpu.dimension_semantics<parallel>], iteration_bounds = array<i64: 1>, scalar_prefetch = 0 : i64, scratch_operands = 0 : i64, tpu.core_type = #tpu.core_type<tc>, window_params = [{transform_indices = @transform_0, window_bounds = array<i64: 128, 32>}, {transform_indices = @transform_1, window_bounds = array<i64: 2, 8, 128>}, {transform_indices = @transform_2, window_bounds = array<i64: 8, 128>}, {pipeline_mode = #tpu.pipeline_mode<synchronous>, transform_indices = @transform_3, window_bounds = array<i64: 16, 32>}, {pipeline_mode = #tpu.pipeline_mode<synchronous>, transform_indices = @transform_4, window_bounds = array<i64: 16, 1>}, {pipeline_mode = #tpu.pipeline_mode<synchronous>, transform_indices = @transform_5, window_bounds = array<i64: 16, 16>}, {transform_indices = @transform_6, window_bounds = array<i64: 2, 16, 128>}, {transform_indices = @transform_7, window_bounds = array<i64: 16, 128>}, {transform_indices = @transform_8, window_bounds = array<i64: 16, 128>}]} {
    %c0 = arith.constant 0 : index
    %c0_0 = arith.constant 0 : index
    %0 = vector.load %arg4[%c0, %c0_0] : memref<16x32xf32, #tpu.memory_space<vmem>>, vector<16x32xf32>
    %c0_1 = arith.constant 0 : index
    %c0_2 = arith.constant 0 : index
    %1 = vector.load %arg5[%c0_1, %c0_2] : memref<16x1xf32, #tpu.memory_space<vmem>>, vector<16x1xf32>
    %c0_3 = arith.constant 0 : index
    %c0_4 = arith.constant 0 : index
    %2 = vector.load %arg6[%c0_3, %c0_4] : memref<16x16xf32, #tpu.memory_space<vmem>>, vector<16x16xf32>
    %c0_5 = arith.constant 0 : index
    %c0_6 = arith.constant 0 : index
    %3 = vector.load %arg1[%c0_5, %c0_6] : memref<128x32xf32, #tpu.memory_space<vmem>>, vector<128x32xf32>
    %cst = arith.constant dense<0.000000e+00> : vector<16x128xf32>
    %4 = tpu.matmul %0, %3, %cst {dimension_numbers = #tpu.dot_dimension_numbers<[1], [1], [0], [0], [0, 0, 1, 0], [], []>, precision = #tpu.contract_precision<fp32>} : vector<16x32xf32>, vector<128x32xf32>, vector<16x128xf32> -> vector<16x128xf32>
    %5 = vector.broadcast %1 : vector<16x1xf32> to vector<16x128xf32>
    %6 = arith.addf %4, %5 : vector<16x128xf32>
    %cst_7 = arith.constant dense<0xFF800000> : vector<128xf32>
    %7 = vector.multi_reduction <maximumf>, %6, %cst_7 [0] : vector<16x128xf32> to vector<128xf32>
    %8 = vector.shape_cast %7 : vector<128xf32> to vector<1x128xf32>
    %9 = vector.broadcast %8 : vector<1x128xf32> to vector<16x128xf32>
    %10 = arith.subf %6, %9 : vector<16x128xf32>
    %11 = math.exp %10 : vector<16x128xf32>
    %cst_8 = arith.constant dense<0.000000e+00> : vector<128xf32>
    %12 = vector.multi_reduction <add>, %11, %cst_8 [0] : vector<16x128xf32> to vector<128xf32>
    %13 = vector.shape_cast %12 : vector<128xf32> to vector<1x128xf32>
    %14 = tpu.reciprocal %13 : vector<1x128xf32> -> vector<1x128xf32>
    %15 = vector.broadcast %14 : vector<1x128xf32> to vector<16x128xf32>
    %16 = arith.mulf %11, %15 : vector<16x128xf32>
    %cst_9 = arith.constant 0.000000e+00 : f32
    %17 = vector.broadcast %cst_9 : f32 to vector<1x128xf32>
    %18 = vector.extract_strided_slice %16 {offsets = [0, 0], sizes = [15, 128], strides = [1, 1]} : vector<16x128xf32> to vector<15x128xf32>
    %19 = tpu.concatenate %17, %18 in 0 : vector<1x128xf32>, vector<15x128xf32> -> vector<16x128xf32>
    %c0_10 = arith.constant 0 : index
    %c0_11 = arith.constant 0 : index
    %20 = vector.load %arg9[%c0_10, %c0_11] : memref<16x128xf32, #tpu.memory_space<vmem>>, vector<16x128xf32>
    tpu.vector_store %arg9[%c0_10, %c0_11], %19 {strides = array<i32>} : memref<16x128xf32, #tpu.memory_space<vmem>>, vector<16x128xf32>,
    %cst_12 = arith.constant dense<0.000000e+00> : vector<16x128xf32>
    %21 = tpu.matmul %2, %16, %cst_12 {dimension_numbers = #tpu.dot_dimension_numbers<[1], [0], [0], [1], [0, 0, 1, 1], [], []>, precision = #tpu.contract_precision<fp32>} : vector<16x16xf32>, vector<16x128xf32>, vector<16x128xf32> -> vector<16x128xf32>
    %cst_13 = arith.constant 0.000000e+00 : f32
    %cst_14 = arith.constant 1.000000e+00 : f32
    %22 = vector.broadcast %cst_13 : f32 to vector<16x128xf32>
    %23 = arith.maximumf %22, %21 : vector<16x128xf32>
    %24 = vector.broadcast %cst_14 : f32 to vector<16x128xf32>
    %25 = arith.minimumf %24, %23 : vector<16x128xf32>
    %c0_15 = arith.constant 0 : index
    %c0_16 = arith.constant 0 : index
    %26 = vector.load %arg8[%c0_15, %c0_16] : memref<16x128xf32, #tpu.memory_space<vmem>>, vector<16x128xf32>
    tpu.vector_store %arg8[%c0_15, %c0_16], %25 {strides = array<i32>} : memref<16x128xf32, #tpu.memory_space<vmem>>, vector<16x128xf32>,
    %cst_17 = arith.constant 1.000000e+00 : f32
    %27 = vector.broadcast %cst_17 : f32 to vector<16x128xf32>
    %28 = arith.subf %27, %25 : vector<16x128xf32>
    %cst_18 = arith.constant 1.000000e+00 : f32
    %29 = vector.broadcast %cst_18 : f32 to vector<16x128xf32>
    %30 = arith.mulf %28, %29 : vector<16x128xf32>
    %31 = arith.mulf %25, %29 : vector<16x128xf32>
    %32 = arith.mulf %28, %30 : vector<16x128xf32>
    %33 = arith.mulf %25, %30 : vector<16x128xf32>
    %34 = arith.mulf %28, %31 : vector<16x128xf32>
    %35 = arith.addf %33, %34 : vector<16x128xf32>
    %36 = arith.mulf %25, %31 : vector<16x128xf32>
    %37 = arith.mulf %28, %32 : vector<16x128xf32>
    %38 = arith.mulf %25, %32 : vector<16x128xf32>
    %39 = arith.mulf %28, %35 : vector<16x128xf32>
    %40 = arith.addf %38, %39 : vector<16x128xf32>
    %41 = arith.mulf %25, %35 : vector<16x128xf32>
    %42 = arith.mulf %28, %36 : vector<16x128xf32>
    %43 = arith.addf %41, %42 : vector<16x128xf32>
    %44 = arith.mulf %25, %36 : vector<16x128xf32>
    %45 = arith.mulf %28, %37 : vector<16x128xf32>
    %46 = arith.mulf %25, %37 : vector<16x128xf32>
    %47 = arith.mulf %28, %40 : vector<16x128xf32>
    %48 = arith.addf %46, %47 : vector<16x128xf32>
    %49 = arith.mulf %25, %40 : vector<16x128xf32>
    %50 = arith.mulf %28, %43 : vector<16x128xf32>
    %51 = arith.addf %49, %50 : vector<16x128xf32>
    %52 = arith.mulf %25, %43 : vector<16x128xf32>
    %53 = arith.mulf %28, %44 : vector<16x128xf32>
    %54 = arith.addf %52, %53 : vector<16x128xf32>
    %55 = arith.mulf %25, %44 : vector<16x128xf32>
    %56 = arith.mulf %28, %45 : vector<16x128xf32>
    %57 = arith.mulf %25, %45 : vector<16x128xf32>
    %58 = arith.mulf %28, %48 : vector<16x128xf32>
    %59 = arith.addf %57, %58 : vector<16x128xf32>
    %60 = arith.mulf %25, %48 : vector<16x128xf32>
    %61 = arith.mulf %28, %51 : vector<16x128xf32>
    %62 = arith.addf %60, %61 : vector<16x128xf32>
    %63 = arith.mulf %25, %51 : vector<16x128xf32>
    %64 = arith.mulf %28, %54 : vector<16x128xf32>
    %65 = arith.addf %63, %64 : vector<16x128xf32>
    %66 = arith.mulf %25, %54 : vector<16x128xf32>
    %67 = arith.mulf %28, %55 : vector<16x128xf32>
    %68 = arith.addf %66, %67 : vector<16x128xf32>
    %69 = arith.mulf %25, %55 : vector<16x128xf32>
    %70 = arith.mulf %28, %56 : vector<16x128xf32>
    %71 = arith.mulf %25, %56 : vector<16x128xf32>
    %72 = arith.mulf %28, %59 : vector<16x128xf32>
    %73 = arith.addf %71, %72 : vector<16x128xf32>
    %74 = arith.mulf %25, %59 : vector<16x128xf32>
    %75 = arith.mulf %28, %62 : vector<16x128xf32>
    %76 = arith.addf %74, %75 : vector<16x128xf32>
    %77 = arith.mulf %25, %62 : vector<16x128xf32>
    %78 = arith.mulf %28, %65 : vector<16x128xf32>
    %79 = arith.addf %77, %78 : vector<16x128xf32>
    %80 = arith.mulf %25, %65 : vector<16x128xf32>
    %81 = arith.mulf %28, %68 : vector<16x128xf32>
    %82 = arith.addf %80, %81 : vector<16x128xf32>
    %83 = arith.mulf %25, %68 : vector<16x128xf32>
    %84 = arith.mulf %28, %69 : vector<16x128xf32>
    %85 = arith.addf %83, %84 : vector<16x128xf32>
    %86 = arith.mulf %25, %69 : vector<16x128xf32>
    %c0_19 = arith.constant 0 : index
    %c0_20 = arith.constant 0 : index
    %87 = vector.load %arg3[%c0_19, %c0_20] : memref<8x128xf32, #tpu.memory_space<vmem>>, vector<8x128xf32>
    %c0_21 = arith.constant 0 : index
    %c0_22 = arith.constant 0 : index
    %c0_23 = arith.constant 0 : index
    %88 = vector.load %arg2[%c0_21, %c0_22, %c0_23] : memref<2x8x128xf32, #tpu.memory_space<vmem>>, vector<2x8x128xf32>
    %cst_24 = arith.constant 0.000000e+00 : f32
    %89 = vector.broadcast %cst_24 : f32 to vector<16x128xf32>
    %cst_25 = arith.constant 0.000000e+00 : f32
    %90 = vector.broadcast %cst_25 : f32 to vector<16x128xf32>
    %cst_26 = arith.constant 0.000000e+00 : f32
    %91 = vector.broadcast %cst_26 : f32 to vector<16x128xf32>
    %92 = arith.mulf %28, %70 : vector<16x128xf32>
    %93 = vector.extract_strided_slice %87 {offsets = [0, 0], sizes = [1, 128], strides = [1, 1]} : vector<8x128xf32> to vector<1x128xf32>
    %94 = vector.broadcast %93 : vector<1x128xf32> to vector<16x128xf32>
    %95 = arith.mulf %94, %92 : vector<16x128xf32>
    %96 = arith.addf %89, %95 : vector<16x128xf32>
    %97 = vector.extract_strided_slice %88 {offsets = [0, 0, 0], sizes = [1, 1, 128], strides = [1, 1, 1]} : vector<2x8x128xf32> to vector<1x1x128xf32>
    %98 = vector.shape_cast %97 : vector<1x1x128xf32> to vector<1x128xf32>
    %99 = vector.broadcast %98 : vector<1x128xf32> to vector<16x128xf32>
    %100 = arith.mulf %99, %95 : vector<16x128xf32>
    %101 = arith.addf %90, %100 : vector<16x128xf32>
    %102 = vector.extract_strided_slice %88 {offsets = [1, 0, 0], sizes = [1, 1, 128], strides = [1, 1, 1]} : vector<2x8x128xf32> to vector<1x1x128xf32>
    %103 = vector.shape_cast %102 : vector<1x1x128xf32> to vector<1x128xf32>
    %104 = vector.broadcast %103 : vector<1x128xf32> to vector<16x128xf32>
    %105 = arith.mulf %104, %95 : vector<16x128xf32>
    %106 = arith.addf %91, %105 : vector<16x128xf32>
    %107 = arith.mulf %25, %70 : vector<16x128xf32>
    %108 = arith.mulf %28, %73 : vector<16x128xf32>
    %109 = arith.addf %107, %108 : vector<16x128xf32>
    %110 = vector.extract_strided_slice %87 {offsets = [1, 0], sizes = [1, 128], strides = [1, 1]} : vector<8x128xf32> to vector<1x128xf32>
    %111 = vector.broadcast %110 : vector<1x128xf32> to vector<16x128xf32>
    %112 = arith.mulf %111, %109 : vector<16x128xf32>
    %113 = arith.addf %96, %112 : vector<16x128xf32>
    %114 = vector.extract_strided_slice %88 {offsets = [0, 1, 0], sizes = [1, 1, 128], strides = [1, 1, 1]} : vector<2x8x128xf32> to vector<1x1x128xf32>
    %115 = vector.shape_cast %114 : vector<1x1x128xf32> to vector<1x128xf32>
    %116 = vector.broadcast %115 : vector<1x128xf32> to vector<16x128xf32>
    %117 = arith.mulf %116, %112 : vector<16x128xf32>
    %118 = arith.addf %101, %117 : vector<16x128xf32>
    %119 = vector.extract_strided_slice %88 {offsets = [1, 1, 0], sizes = [1, 1, 128], strides = [1, 1, 1]} : vector<2x8x128xf32> to vector<1x1x128xf32>
    %120 = vector.shape_cast %119 : vector<1x1x128xf32> to vector<1x128xf32>
    %121 = vector.broadcast %120 : vector<1x128xf32> to vector<16x128xf32>
    %122 = arith.mulf %121, %112 : vector<16x128xf32>
    %123 = arith.addf %106, %122 : vector<16x128xf32>
    %124 = arith.mulf %25, %73 : vector<16x128xf32>
    %125 = arith.mulf %28, %76 : vector<16x128xf32>
    %126 = arith.addf %124, %125 : vector<16x128xf32>
    %127 = vector.extract_strided_slice %87 {offsets = [2, 0], sizes = [1, 128], strides = [1, 1]} : vector<8x128xf32> to vector<1x128xf32>
    %128 = vector.broadcast %127 : vector<1x128xf32> to vector<16x128xf32>
    %129 = arith.mulf %128, %126 : vector<16x128xf32>
    %130 = arith.addf %113, %129 : vector<16x128xf32>
    %131 = vector.extract_strided_slice %88 {offsets = [0, 2, 0], sizes = [1, 1, 128], strides = [1, 1, 1]} : vector<2x8x128xf32> to vector<1x1x128xf32>
    %132 = vector.shape_cast %131 : vector<1x1x128xf32> to vector<1x128xf32>
    %133 = vector.broadcast %132 : vector<1x128xf32> to vector<16x128xf32>
    %134 = arith.mulf %133, %129 : vector<16x128xf32>
    %135 = arith.addf %118, %134 : vector<16x128xf32>
    %136 = vector.extract_strided_slice %88 {offsets = [1, 2, 0], sizes = [1, 1, 128], strides = [1, 1, 1]} : vector<2x8x128xf32> to vector<1x1x128xf32>
    %137 = vector.shape_cast %136 : vector<1x1x128xf32> to vector<1x128xf32>
    %138 = vector.broadcast %137 : vector<1x128xf32> to vector<16x128xf32>
    %139 = arith.mulf %138, %129 : vector<16x128xf32>
    %140 = arith.addf %123, %139 : vector<16x128xf32>
    %141 = arith.mulf %25, %76 : vector<16x128xf32>
    %142 = arith.mulf %28, %79 : vector<16x128xf32>
    %143 = arith.addf %141, %142 : vector<16x128xf32>
    %144 = vector.extract_strided_slice %87 {offsets = [3, 0], sizes = [1, 128], strides = [1, 1]} : vector<8x128xf32> to vector<1x128xf32>
    %145 = vector.broadcast %144 : vector<1x128xf32> to vector<16x128xf32>
    %146 = arith.mulf %145, %143 : vector<16x128xf32>
    %147 = arith.addf %130, %146 : vector<16x128xf32>
    %148 = vector.extract_strided_slice %88 {offsets = [0, 3, 0], sizes = [1, 1, 128], strides = [1, 1, 1]} : vector<2x8x128xf32> to vector<1x1x128xf32>
    %149 = vector.shape_cast %148 : vector<1x1x128xf32> to vector<1x128xf32>
    %150 = vector.broadcast %149 : vector<1x128xf32> to vector<16x128xf32>
    %151 = arith.mulf %150, %146 : vector<16x128xf32>
    %152 = arith.addf %135, %151 : vector<16x128xf32>
    %153 = vector.extract_strided_slice %88 {offsets = [1, 3, 0], sizes = [1, 1, 128], strides = [1, 1, 1]} : vector<2x8x128xf32> to vector<1x1x128xf32>
    %154 = vector.shape_cast %153 : vector<1x1x128xf32> to vector<1x128xf32>
    %155 = vector.broadcast %154 : vector<1x128xf32> to vector<16x128xf32>
    %156 = arith.mulf %155, %146 : vector<16x128xf32>
    %157 = arith.addf %140, %156 : vector<16x128xf32>
    %158 = arith.mulf %25, %79 : vector<16x128xf32>
    %159 = arith.mulf %28, %82 : vector<16x128xf32>
    %160 = arith.addf %158, %159 : vector<16x128xf32>
    %161 = vector.extract_strided_slice %87 {offsets = [4, 0], sizes = [1, 128], strides = [1, 1]} : vector<8x128xf32> to vector<1x128xf32>
    %162 = vector.broadcast %161 : vector<1x128xf32> to vector<16x128xf32>
    %163 = arith.mulf %162, %160 : vector<16x128xf32>
    %164 = arith.addf %147, %163 : vector<16x128xf32>
    %165 = vector.extract_strided_slice %88 {offsets = [0, 4, 0], sizes = [1, 1, 128], strides = [1, 1, 1]} : vector<2x8x128xf32> to vector<1x1x128xf32>
    %166 = vector.shape_cast %165 : vector<1x1x128xf32> to vector<1x128xf32>
    %167 = vector.broadcast %166 : vector<1x128xf32> to vector<16x128xf32>
    %168 = arith.mulf %167, %163 : vector<16x128xf32>
    %169 = arith.addf %152, %168 : vector<16x128xf32>
    %170 = vector.extract_strided_slice %88 {offsets = [1, 4, 0], sizes = [1, 1, 128], strides = [1, 1, 1]} : vector<2x8x128xf32> to vector<1x1x128xf32>
    %171 = vector.shape_cast %170 : vector<1x1x128xf32> to vector<1x128xf32>
    %172 = vector.broadcast %171 : vector<1x128xf32> to vector<16x128xf32>
    %173 = arith.mulf %172, %163 : vector<16x128xf32>
    %174 = arith.addf %157, %173 : vector<16x128xf32>
    %175 = arith.mulf %25, %82 : vector<16x128xf32>
    %176 = arith.mulf %28, %85 : vector<16x128xf32>
    %177 = arith.addf %175, %176 : vector<16x128xf32>
    %178 = vector.extract_strided_slice %87 {offsets = [5, 0], sizes = [1, 128], strides = [1, 1]} : vector<8x128xf32> to vector<1x128xf32>
    %179 = vector.broadcast %178 : vector<1x128xf32> to vector<16x128xf32>
    %180 = arith.mulf %179, %177 : vector<16x128xf32>
    %181 = arith.addf %164, %180 : vector<16x128xf32>
    %182 = vector.extract_strided_slice %88 {offsets = [0, 5, 0], sizes = [1, 1, 128], strides = [1, 1, 1]} : vector<2x8x128xf32> to vector<1x1x128xf32>
    %183 = vector.shape_cast %182 : vector<1x1x128xf32> to vector<1x128xf32>
    %184 = vector.broadcast %183 : vector<1x128xf32> to vector<16x128xf32>
    %185 = arith.mulf %184, %180 : vector<16x128xf32>
    %186 = arith.addf %169, %185 : vector<16x128xf32>
    %187 = vector.extract_strided_slice %88 {offsets = [1, 5, 0], sizes = [1, 1, 128], strides = [1, 1, 1]} : vector<2x8x128xf32> to vector<1x1x128xf32>
    %188 = vector.shape_cast %187 : vector<1x1x128xf32> to vector<1x128xf32>
    %189 = vector.broadcast %188 : vector<1x128xf32> to vector<16x128xf32>
    %190 = arith.mulf %189, %180 : vector<16x128xf32>
    %191 = arith.addf %174, %190 : vector<16x128xf32>
    %192 = arith.mulf %25, %85 : vector<16x128xf32>
    %193 = arith.mulf %28, %86 : vector<16x128xf32>
    %194 = arith.addf %192, %193 : vector<16x128xf32>
    %195 = vector.extract_strided_slice %87 {offsets = [6, 0], sizes = [1, 128], strides = [1, 1]} : vector<8x128xf32> to vector<1x128xf32>
    %196 = vector.broadcast %195 : vector<1x128xf32> to vector<16x128xf32>
    %197 = arith.mulf %196, %194 : vector<16x128xf32>
    %198 = arith.addf %181, %197 : vector<16x128xf32>
    %199 = vector.extract_strided_slice %88 {offsets = [0, 6, 0], sizes = [1, 1, 128], strides = [1, 1, 1]} : vector<2x8x128xf32> to vector<1x1x128xf32>
    %200 = vector.shape_cast %199 : vector<1x1x128xf32> to vector<1x128xf32>
    %201 = vector.broadcast %200 : vector<1x128xf32> to vector<16x128xf32>
    %202 = arith.mulf %201, %197 : vector<16x128xf32>
    %203 = arith.addf %186, %202 : vector<16x128xf32>
    %204 = vector.extract_strided_slice %88 {offsets = [1, 6, 0], sizes = [1, 1, 128], strides = [1, 1, 1]} : vector<2x8x128xf32> to vector<1x1x128xf32>
    %205 = vector.shape_cast %204 : vector<1x1x128xf32> to vector<1x128xf32>
    %206 = vector.broadcast %205 : vector<1x128xf32> to vector<16x128xf32>
    %207 = arith.mulf %206, %197 : vector<16x128xf32>
    %208 = arith.addf %191, %207 : vector<16x128xf32>
    %209 = arith.mulf %25, %86 : vector<16x128xf32>
    %210 = vector.extract_strided_slice %87 {offsets = [7, 0], sizes = [1, 128], strides = [1, 1]} : vector<8x128xf32> to vector<1x128xf32>
    %211 = vector.broadcast %210 : vector<1x128xf32> to vector<16x128xf32>
    %212 = arith.mulf %211, %209 : vector<16x128xf32>
    %213 = arith.addf %198, %212 : vector<16x128xf32>
    %214 = vector.extract_strided_slice %88 {offsets = [0, 7, 0], sizes = [1, 1, 128], strides = [1, 1, 1]} : vector<2x8x128xf32> to vector<1x1x128xf32>
    %215 = vector.shape_cast %214 : vector<1x1x128xf32> to vector<1x128xf32>
    %216 = vector.broadcast %215 : vector<1x128xf32> to vector<16x128xf32>
    %217 = arith.mulf %216, %212 : vector<16x128xf32>
    %218 = arith.addf %203, %217 : vector<16x128xf32>
    %219 = vector.extract_strided_slice %88 {offsets = [1, 7, 0], sizes = [1, 1, 128], strides = [1, 1, 1]} : vector<2x8x128xf32> to vector<1x1x128xf32>
    %220 = vector.shape_cast %219 : vector<1x1x128xf32> to vector<1x128xf32>
    %221 = vector.broadcast %220 : vector<1x128xf32> to vector<16x128xf32>
    %222 = arith.mulf %221, %212 : vector<16x128xf32>
    %223 = arith.addf %208, %222 : vector<16x128xf32>
    %224 = tpu.reciprocal %213 {approx = true} : vector<16x128xf32> -> vector<16x128xf32>
    %225 = arith.mulf %213, %224 : vector<16x128xf32>
    %cst_27 = arith.constant 2.000000e+00 : f32
    %226 = vector.broadcast %cst_27 : f32 to vector<16x128xf32>
    %227 = arith.subf %226, %225 : vector<16x128xf32>
    %228 = arith.mulf %224, %227 : vector<16x128xf32>
    %229 = arith.mulf %218, %228 : vector<16x128xf32>
    %c0_28 = arith.constant 0 : index
    %c0_29 = arith.constant 0 : index
    %c0_30 = arith.constant 0 : index
    %230 = vector.load %arg7[%c0_28, %c0_29, %c0_30] : memref<2x16x128xf32, #tpu.memory_space<vmem>>, vector<1x16x128xf32>
    %231 = vector.shape_cast %230 : vector<1x16x128xf32> to vector<16x128xf32>
    %232 = vector.shape_cast %229 : vector<16x128xf32> to vector<1x16x128xf32>
    tpu.vector_store %arg7[%c0_28, %c0_29, %c0_30], %232 {strides = array<i32>} : memref<2x16x128xf32, #tpu.memory_space<vmem>>, vector<1x16x128xf32>,
    %233 = arith.mulf %223, %228 : vector<16x128xf32>
    %c1 = arith.constant 1 : index
    %c0_31 = arith.constant 0 : index
    %c0_32 = arith.constant 0 : index
    %234 = vector.load %arg7[%c1, %c0_31, %c0_32] : memref<2x16x128xf32, #tpu.memory_space<vmem>>, vector<1x16x128xf32>
    %235 = vector.shape_cast %234 : vector<1x16x128xf32> to vector<16x128xf32>
    %236 = vector.shape_cast %233 : vector<16x128xf32> to vector<1x16x128xf32>
    tpu.vector_store %arg7[%c1, %c0_31, %c0_32], %236 {strides = array<i32>} : memref<2x16x128xf32, #tpu.memory_space<vmem>>, vector<1x16x128xf32>,
    return
  }
  func.func @transform_0(%arg0: i32) -> (i32, i32) {
    %c0_i32 = arith.constant 0 : i32
    %c0_i32_0 = arith.constant 0 : i32
    return %arg0, %c0_i32 : i32, i32
  }
  func.func @transform_1(%arg0: i32) -> (i32, i32, i32) {
    %c0_i32 = arith.constant 0 : i32
    %c0_i32_0 = arith.constant 0 : i32
    %c0_i32_1 = arith.constant 0 : i32
    return %c0_i32, %c0_i32_0, %arg0 : i32, i32, i32
  }
  func.func @transform_2(%arg0: i32) -> (i32, i32) {
    %c0_i32 = arith.constant 0 : i32
    %c0_i32_0 = arith.constant 0 : i32
    return %c0_i32, %arg0 : i32, i32
  }
  func.func @transform_3(%arg0: i32) -> (i32, i32) {
    %c0_i32 = arith.constant 0 : i32
    %c0_i32_0 = arith.constant 0 : i32
    %c0_i32_1 = arith.constant 0 : i32
    return %c0_i32, %c0_i32_0 : i32, i32
  }
  func.func @transform_4(%arg0: i32) -> (i32, i32) {
    %c0_i32 = arith.constant 0 : i32
    %c0_i32_0 = arith.constant 0 : i32
    %c0_i32_1 = arith.constant 0 : i32
    return %c0_i32, %c0_i32_0 : i32, i32
  }
  func.func @transform_5(%arg0: i32) -> (i32, i32) {
    %c0_i32 = arith.constant 0 : i32
    %c0_i32_0 = arith.constant 0 : i32
    %c0_i32_1 = arith.constant 0 : i32
    return %c0_i32, %c0_i32_0 : i32, i32
  }
  func.func @transform_6(%arg0: i32) -> (i32, i32, i32) {
    %c0_i32 = arith.constant 0 : i32
    %c0_i32_0 = arith.constant 0 : i32
    %c0_i32_1 = arith.constant 0 : i32
    return %c0_i32, %c0_i32_0, %arg0 : i32, i32, i32
  }
  func.func @transform_7(%arg0: i32) -> (i32, i32) {
    %c0_i32 = arith.constant 0 : i32
    %c0_i32_0 = arith.constant 0 : i32
    return %c0_i32, %arg0 : i32, i32
  }
  func.func @transform_8(%arg0: i32) -> (i32, i32) {
    %c0_i32 = arith.constant 0 : i32
    %c0_i32_0 = arith.constant 0 : i32
    return %c0_i32, %arg0 : i32, i32
  }
}

</mosaic_0001>

<llo_original>
// kernel: tpu_custom_call.1
$region0: #{tpu_custom_call.1}
  #allocation0 [shape = 'u32[]', space=smem, size = 0x4, offset = 0x4, fixed_abs, tag = 'smem constant byte address 0x4 - core index']
  #allocation1 [shape = 'u32[72,128]{1,0:T(1,128)}', space=vmem, size = 0x9000, scoped, tag = 'internal scratch']
  %s0 = inlined_call_operand.vmem [shape: f32[128,32], index: 0, kind: input, shape index: {}]
  %s1 = inlined_call_operand.vmem [shape: f32[2,8,128], index: 1, kind: input, shape index: {}]
  %s2 = inlined_call_operand.vmem [shape: f32[8,128], index: 2, kind: input, shape index: {}]
  %s3 = inlined_call_operand.vmem [shape: f32[16,32], index: 3, kind: input, shape index: {}]
  %s4 = inlined_call_operand.vmem [shape: f32[16,1], index: 4, kind: input, shape index: {}]
  %s5 = inlined_call_operand.vmem [shape: f32[16,16], index: 5, kind: input, shape index: {}]
  %s6 = inlined_call_operand.hbm [shape: f32[2,16,128], index: 6, kind: output, shape index: {0}]
  %s7 = inlined_call_operand.hbm [shape: f32[16,128], index: 7, kind: output, shape index: {1}]
  %s8 = inlined_call_operand.hbm [shape: f32[16,128], index: 8, kind: output, shape index: {2}]
  %9 = xla_tuple %s6, %s7, %s8
  %s10 = sld [smem:[#allocation0]]
  $region50: #{tpu_custom_call.1} parent=0
    _
  %s12 = ssub.s32 1, %s10
  %s13 = scalar_select 0, %s12, %s10
  $region1: #{tpu_custom_call.1} parent=0
    #allocation2 [shape = 'u8[16384]{0}', space=vmem, size = 0x4000, scoped, tag = 'output window, operand 0, single buffered']
    #allocation3 [shape = 's32[1]{0}', space=sflag, size = 0x4, scoped, tag = 'scoped memory for tpu_custom_call.1']
    #allocation4 [shape = 'u8[8192]{0}', space=vmem, size = 0x2000, scoped, tag = 'output window, operand 1, single buffered']
    #allocation5 [shape = 's32[1]{0}', space=sflag, size = 0x4, scoped, tag = 'scoped memory for tpu_custom_call.1']
    #allocation6 [shape = 'u8[8192]{0}', space=vmem, size = 0x2000, scoped, tag = 'output window, operand 2, single buffered']
    %14 = vsyncpa [#allocation3], 0
    %15 = vsyncpa [#allocation5], 0
    // Predicated region
    $region2: #{tpu_custom_call.1} parent=1 // pred_check
      _
    $region3: #{tpu_custom_call.1} parent=1 // pred_check_branch
      %17 = sbr.rel (0) target = $region5
    $region4: #{tpu_custom_call.1} parent=1 // pred_region
      _
    $region5: #{tpu_custom_call.1} parent=1 // pred_fallthru
      _
    // Predicated region
    $region6: #{tpu_custom_call.1} parent=1 // pred_check
      _
    $region7: #{tpu_custom_call.1} parent=1 // pred_check_branch
      %19 = sbr.rel (0) target = $region9
    $region8: #{tpu_custom_call.1} parent=1 // pred_region
      _
    $region9: #{tpu_custom_call.1} parent=1 // pred_fallthru
      _
    // Predicated region
    $region10: #{tpu_custom_call.1} parent=1 // pred_check
      _
    $region11: #{tpu_custom_call.1} parent=1 // pred_check_branch
      %21 = sbr.rel (0) target = $region13
    $region12: #{tpu_custom_call.1} parent=1 // pred_region
      _
    $region13: #{tpu_custom_call.1} parent=1 // pred_fallthru
      _
    // Predicated region
    $region14: #{tpu_custom_call.1} parent=1 // pred_check
      _
    $region15: #{tpu_custom_call.1} parent=1 // pred_check_branch
      %23 = sbr.rel (0) target = $region17
    $region16: #{tpu_custom_call.1} parent=1 // pred_region
      _
    $region17: #{tpu_custom_call.1} parent=1 // pred_fallthru
      _
    // Predicated region
    $region18: #{tpu_custom_call.1} parent=1 // pred_check
      _
    $region19: #{tpu_custom_call.1} parent=1 // pred_check_branch
      %25 = sbr.rel (0) target = $region21
    $region20: #{tpu_custom_call.1} parent=1 // pred_region
      _
    $region21: #{tpu_custom_call.1} parent=1 // pred_fallthru
      _
    // Predicated region
    $region22: #{tpu_custom_call.1} parent=1 // pred_check
      _
    $region23: #{tpu_custom_call.1} parent=1 // pred_check_branch
      %27 = sbr.rel (0) target = $region25
    $region24: #{tpu_custom_call.1} parent=1 // pred_region
      _
    $region25: #{tpu_custom_call.1} parent=1 // pred_fallthru
      _
    %v28 = vld [vmem:[%s3] sm:$0xff]
    %v29 = vld [vmem:[%s3 + $0x8] sm:$0xff]
    %v30 = vld [vmem:[%s4] sm:$0xff]
    %v31 = vld [vmem:[%s4 + $0x8] sm:$0xff]
    %v32 = vld [vmem:[%s5] sm:$0xff]
    %v33 = vld [vmem:[%s5 + $0x8] sm:$0xff]
    %v34 = vld [vmem:[%s0] sm:$0xff]
    %v35 = vld [vmem:[%s0 + $0x8] sm:$0xff]
    %v36 = vld [vmem:[%s0 + $0x10] sm:$0xff]
    %v37 = vld [vmem:[%s0 + $0x18] sm:$0xff]
    %v38 = vld [vmem:[%s0 + $0x20] sm:$0xff]
    %v39 = vld [vmem:[%s0 + $0x28] sm:$0xff]
    %v40 = vld [vmem:[%s0 + $0x30] sm:$0xff]
    %v41 = vld [vmem:[%s0 + $0x38] sm:$0xff]
    %v42 = vld [vmem:[%s0 + $0x40] sm:$0xff]
    %v43 = vld [vmem:[%s0 + $0x48] sm:$0xff]
    %v44 = vld [vmem:[%s0 + $0x50] sm:$0xff]
    %v45 = vld [vmem:[%s0 + $0x58] sm:$0xff]
    %v46 = vld [vmem:[%s0 + $0x60] sm:$0xff]
    %v47 = vld [vmem:[%s0 + $0x68] sm:$0xff]
    %v48 = vld [vmem:[%s0 + $0x70] sm:$0xff]
    %v49 = vld [vmem:[%s0 + $0x78] sm:$0xff]
    %51 = vset.pattern.permute.xlu0 0
    %52 = vperm.xlu0 %51, %v30
    %v53 = vpop.permute.xlu0 %52
    %56 = vset.pattern.permute.xlu0 0
    %57 = vperm.xlu0 %56, %v31
    %v58 = vpop.permute.xlu0 %57
    %vm60 = vcmask 261120
    %v62 = vsel %vm60, %v28, 0
    %v65 = vsel %vm60, %v29, 0
    %v68 = vsel %vm60, %v34, 0
    %v71 = vsel %vm60, %v35, 0
    %v74 = vsel %vm60, %v36, 0
    %v77 = vsel %vm60, %v37, 0
    %v80 = vsel %vm60, %v38, 0
    %v83 = vsel %vm60, %v39, 0
    %v86 = vsel %vm60, %v40, 0
    %v89 = vsel %vm60, %v41, 0
    %v92 = vsel %vm60, %v42, 0
    %v95 = vsel %vm60, %v43, 0
    %v98 = vsel %vm60, %v44, 0
    %v101 = vsel %vm60, %v45, 0
    %v104 = vsel %vm60, %v46, 0
    %v107 = vsel %vm60, %v47, 0
    %v110 = vsel %vm60, %v48, 0
    %v113 = vsel %vm60, %v49, 0
    %v115 = vand.u32 %v113, 4294901760
    %116 = vmatpush.xpose.msra.mxu0 %v115
    %v117 = vand.u32 %v110, 4294901760
    %118 = vmatpush.xpose.msra.mxu0 %v117
    %v119 = vand.u32 %v107, 4294901760
    %120 = vmatpush.xpose.msra.mxu0 %v119
    %v121 = vand.u32 %v104, 4294901760
    %122 = vmatpush.xpose.msra.mxu0 %v121
    %v123 = vand.u32 %v101, 4294901760
    %124 = vmatpush.xpose.msra.mxu0 %v123
    %v125 = vand.u32 %v98, 4294901760
    %126 = vmatpush.xpose.msra.mxu0 %v125
    %v127 = vand.u32 %v95, 4294901760
    %128 = vmatpush.xpose.msra.mxu0 %v127
    %v129 = vand.u32 %v92, 4294901760
    %130 = vmatpush.xpose.msra.mxu0 %v129
    %v131 = vand.u32 %v89, 4294901760
    %132 = vmatpush.xpose.msra.mxu0 %v131
    %v133 = vand.u32 %v86, 4294901760
    %134 = vmatpush.xpose.msra.mxu0 %v133
    %v135 = vand.u32 %v83, 4294901760
    %136 = vmatpush.xpose.msra.mxu0 %v135
    %v137 = vand.u32 %v80, 4294901760
    %138 = vmatpush.xpose.msra.mxu0 %v137
    %v139 = vand.u32 %v77, 4294901760
    %140 = vmatpush.xpose.msra.mxu0 %v139
    %v141 = vand.u32 %v74, 4294901760
    %142 = vmatpush.xpose.msra.mxu0 %v141
    %v143 = vand.u32 %v71, 4294901760
    %144 = vmatpush.xpose.msra.mxu0 %v143
    %v145 = vand.u32 %v68, 4294901760
    %146 = vmatpush.xpose.msra.mxu0 %v145
    %v147 = vand.u32 %v62, 4294901760
    %v148 = vsub.f32 %v62, %v147
    %v149 = vand.u32 %v148, 4294901760
    %v150 = vsub.f32 %v148, %v149
    %v151 = vand.u32 %v150, 4294901760
    %152 = vmatmul.f32.gmra.mxu0 %v151
    %v153 = vpop.f32.mrf.mxu0
    %v154 = vadd.f32 %v53, %v153
    %v155 = vand.u32 %v65, 4294901760
    %v156 = vsub.f32 %v65, %v155
    %v157 = vand.u32 %v156, 4294901760
    %v158 = vsub.f32 %v156, %v157
    %v159 = vand.u32 %v158, 4294901760
    %160 = vmatmul.f32.gmra.mxu0 %v159
    %v161 = vpop.f32.mrf.mxu0
    %v162 = vadd.f32 %v58, %v161
    %163 = vdwg.mxu0
    %v164 = vand.u32 %v113, 4294901760
    %v165 = vsub.f32 %v113, %v164
    %v166 = vand.u32 %v165, 4294901760
    %v167 = vsub.f32 %v165, %v166
    %v168 = vand.u32 %v167, 4294901760
    %169 = vmatpush.xpose.msra.mxu0 %v168
    %v170 = vand.u32 %v110, 4294901760
    %v171 = vsub.f32 %v110, %v170
    %v172 = vand.u32 %v171, 4294901760
    %v173 = vsub.f32 %v171, %v172
    %v174 = vand.u32 %v173, 4294901760
    %175 = vmatpush.xpose.msra.mxu0 %v174
    %v176 = vand.u32 %v107, 4294901760
    %v177 = vsub.f32 %v107, %v176
    %v178 = vand.u32 %v177, 4294901760
    %v179 = vsub.f32 %v177, %v178
    %v180 = vand.u32 %v179, 4294901760
    %181 = vmatpush.xpose.msra.mxu0 %v180
    %v182 = vand.u32 %v104, 4294901760
    %v183 = vsub.f32 %v104, %v182
    %v184 = vand.u32 %v183, 4294901760
    %v185 = vsub.f32 %v183, %v184
    %v186 = vand.u32 %v185, 4294901760
    %187 = vmatpush.xpose.msra.mxu0 %v186
    %v188 = vand.u32 %v101, 4294901760
    %v189 = vsub.f32 %v101, %v188
    %v190 = vand.u32 %v189, 4294901760
    %v191 = vsub.f32 %v189, %v190
    %v192 = vand.u32 %v191, 4294901760
    %193 = vmatpush.xpose.msra.mxu0 %v192
    %v194 = vand.u32 %v98, 4294901760
    %v195 = vsub.f32 %v98, %v194
    %v196 = vand.u32 %v195, 4294901760
    %v197 = vsub.f32 %v195, %v196
    %v198 = vand.u32 %v197, 4294901760
    %199 = vmatpush.xpose.msra.mxu0 %v198
    %v200 = vand.u32 %v95, 4294901760
    %v201 = vsub.f32 %v95, %v200
    %v202 = vand.u32 %v201, 4294901760
    %v203 = vsub.f32 %v201, %v202
    %v204 = vand.u32 %v203, 4294901760
    %205 = vmatpush.xpose.msra.mxu0 %v204
    %v206 = vand.u32 %v92, 4294901760
    %v207 = vsub.f32 %v92, %v206
    %v208 = vand.u32 %v207, 4294901760
    %v209 = vsub.f32 %v207, %v208
    %v210 = vand.u32 %v209, 4294901760
    %211 = vmatpush.xpose.msra.mxu0 %v210
    %v212 = vand.u32 %v89, 4294901760
    %v213 = vsub.f32 %v89, %v212
    %v214 = vand.u32 %v213, 4294901760
    %v215 = vsub.f32 %v213, %v214
    %v216 = vand.u32 %v215, 4294901760
    %217 = vmatpush.xpose.msra.mxu0 %v216
    %v218 = vand.u32 %v86, 4294901760
    %v219 = vsub.f32 %v86, %v218
    %v220 = vand.u32 %v219, 4294901760
    %v221 = vsub.f32 %v219, %v220
    %v222 = vand.u32 %v221, 4294901760
    %223 = vmatpush.xpose.msra.mxu0 %v222
    %v224 = vand.u32 %v83, 4294901760
    %v225 = vsub.f32 %v83, %v224
    %v226 = vand.u32 %v225, 4294901760
    %v227 = vsub.f32 %v225, %v226
    %v228 = vand.u32 %v227, 4294901760
    %229 = vmatpush.xpose.msra.mxu0 %v228
    %v230 = vand.u32 %v80, 4294901760
    %v231 = vsub.f32 %v80, %v230
    %v232 = vand.u32 %v231, 4294901760
    %v233 = vsub.f32 %v231, %v232
    %v234 = vand.u32 %v233, 4294901760
    %235 = vmatpush.xpose.msra.mxu0 %v234
    %v236 = vand.u32 %v77, 4294901760
    %v237 = vsub.f32 %v77, %v236
    %v238 = vand.u32 %v237, 4294901760
    %v239 = vsub.f32 %v237, %v238
    %v240 = vand.u32 %v239, 4294901760
    %241 = vmatpush.xpose.msra.mxu0 %v240
    %v242 = vand.u32 %v74, 4294901760
    %v243 = vsub.f32 %v74, %v242
    %v244 = vand.u32 %v243, 4294901760
    %v245 = vsub.f32 %v243, %v244
    %v246 = vand.u32 %v245, 4294901760
    %247 = vmatpush.xpose.msra.mxu0 %v246
    %v248 = vand.u32 %v71, 4294901760
    %v249 = vsub.f32 %v71, %v248
    %v250 = vand.u32 %v249, 4294901760
    %v251 = vsub.f32 %v249, %v250
    %v252 = vand.u32 %v251, 4294901760
    %253 = vmatpush.xpose.msra.mxu0 %v252
    %v254 = vand.u32 %v68, 4294901760
    %v255 = vsub.f32 %v68, %v254
    %v256 = vand.u32 %v255, 4294901760
    %v257 = vsub.f32 %v255, %v256
    %v258 = vand.u32 %v257, 4294901760
    %259 = vmatpush.xpose.msra.mxu0 %v258
    %v260 = vand.u32 %v62, 4294901760
    %261 = vmatmul.f32.gmra.mxu0 %v260
    %v262 = vpop.f32.mrf.mxu0
    %v263 = vadd.f32 %v154, %v262
    %v264 = vand.u32 %v65, 4294901760
    %265 = vmatmul.f32.gmra.mxu0 %v264
    %v266 = vpop.f32.mrf.mxu0
    %v267 = vadd.f32 %v162, %v266
    %268 = vdwg.mxu0
    %v269 = vand.u32 %v113, 4294901760
    %v270 = vsub.f32 %v113, %v269
    %271 = vmatpush.xpose.msra.mxu0 %v270
    %v272 = vand.u32 %v110, 4294901760
    %v273 = vsub.f32 %v110, %v272
    %274 = vmatpush.xpose.msra.mxu0 %v273
    %v275 = vand.u32 %v107, 4294901760
    %v276 = vsub.f32 %v107, %v275
    %277 = vmatpush.xpose.msra.mxu0 %v276
    %v278 = vand.u32 %v104, 4294901760
    %v279 = vsub.f32 %v104, %v278
    %280 = vmatpush.xpose.msra.mxu0 %v279
    %v281 = vand.u32 %v101, 4294901760
    %v282 = vsub.f32 %v101, %v281
    %283 = vmatpush.xpose.msra.mxu0 %v282
    %v284 = vand.u32 %v98, 4294901760
    %v285 = vsub.f32 %v98, %v284
    %286 = vmatpush.xpose.msra.mxu0 %v285
    %v287 = vand.u32 %v95, 4294901760
    %v288 = vsub.f32 %v95, %v287
    %289 = vmatpush.xpose.msra.mxu0 %v288
    %v290 = vand.u32 %v92, 4294901760
    %v291 = vsub.f32 %v92, %v290
    %292 = vmatpush.xpose.msra.mxu0 %v291
    %v293 = vand.u32 %v89, 4294901760
    %v294 = vsub.f32 %v89, %v293
    %295 = vmatpush.xpose.msra.mxu0 %v294
    %v296 = vand.u32 %v86, 4294901760
    %v297 = vsub.f32 %v86, %v296
    %298 = vmatpush.xpose.msra.mxu0 %v297
    %v299 = vand.u32 %v83, 4294901760
    %v300 = vsub.f32 %v83, %v299
    %301 = vmatpush.xpose.msra.mxu0 %v300
    %v302 = vand.u32 %v80, 4294901760
    %v303 = vsub.f32 %v80, %v302
    %304 = vmatpush.xpose.msra.mxu0 %v303
    %v305 = vand.u32 %v77, 4294901760
    %v306 = vsub.f32 %v77, %v305
    %307 = vmatpush.xpose.msra.mxu0 %v306
    %v308 = vand.u32 %v74, 4294901760
    %v309 = vsub.f32 %v74, %v308
    %310 = vmatpush.xpose.msra.mxu0 %v309
    %v311 = vand.u32 %v71, 4294901760
    %v312 = vsub.f32 %v71, %v311
    %313 = vmatpush.xpose.msra.mxu0 %v312
    %v314 = vand.u32 %v68, 4294901760
    %v315 = vsub.f32 %v68, %v314
    %316 = vmatpush.xpose.msra.mxu0 %v315
    %v317 = vand.u32 %v62, 4294901760
    %v318 = vsub.f32 %v62, %v317
    %319 = vmatmul.f32.gmra.mxu0 %v318
    %v320 = vpop.f32.mrf.mxu0
    %v321 = vadd.f32 %v263, %v320
    %v322 = vand.u32 %v65, 4294901760
    %v323 = vsub.f32 %v65, %v322
    %324 = vmatmul.f32.gmra.mxu0 %v323
    %v325 = vpop.f32.mrf.mxu0
    %v326 = vadd.f32 %v267, %v325
    %327 = vdwg.mxu0
    %v328 = vand.u32 %v113, 4294901760
    %329 = vmatpush.xpose.msra.mxu0 %v328
    %v330 = vand.u32 %v110, 4294901760
    %331 = vmatpush.xpose.msra.mxu0 %v330
    %v332 = vand.u32 %v107, 4294901760
    %333 = vmatpush.xpose.msra.mxu0 %v332
    %v334 = vand.u32 %v104, 4294901760
    %335 = vmatpush.xpose.msra.mxu0 %v334
    %v336 = vand.u32 %v101, 4294901760
    %337 = vmatpush.xpose.msra.mxu0 %v336
    %v338 = vand.u32 %v98, 4294901760
    %339 = vmatpush.xpose.msra.mxu0 %v338
    %v340 = vand.u32 %v95, 4294901760
    %341 = vmatpush.xpose.msra.mxu0 %v340
    %v342 = vand.u32 %v92, 4294901760
    %343 = vmatpush.xpose.msra.mxu0 %v342
    %v344 = vand.u32 %v89, 4294901760
    %345 = vmatpush.xpose.msra.mxu0 %v344
    %v346 = vand.u32 %v86, 4294901760
    %347 = vmatpush.xpose.msra.mxu0 %v346
    %v348 = vand.u32 %v83, 4294901760
    %349 = vmatpush.xpose.msra.mxu0 %v348
    %v350 = vand.u32 %v80, 4294901760
    %351 = vmatpush.xpose.msra.mxu0 %v350
    %v352 = vand.u32 %v77, 4294901760
    %353 = vmatpush.xpose.msra.mxu0 %v352
    %v354 = vand.u32 %v74, 4294901760
    %355 = vmatpush.xpose.msra.mxu0 %v354
    %v356 = vand.u32 %v71, 4294901760
    %357 = vmatpush.xpose.msra.mxu0 %v356
    %v358 = vand.u32 %v68, 4294901760
    %359 = vmatpush.xpose.msra.mxu0 %v358
    %v360 = vand.u32 %v62, 4294901760
    %v361 = vsub.f32 %v62, %v360
    %v362 = vand.u32 %v361, 4294901760
    %363 = vmatmul.f32.gmra.mxu0 %v362
    %v364 = vpop.f32.mrf.mxu0
    %v365 = vadd.f32 %v321, %v364
    %v366 = vand.u32 %v65, 4294901760
    %v367 = vsub.f32 %v65, %v366
    %v368 = vand.u32 %v367, 4294901760
    %369 = vmatmul.f32.gmra.mxu0 %v368
    %v370 = vpop.f32.mrf.mxu0
    %v371 = vadd.f32 %v326, %v370
    %372 = vdwg.mxu0
    %v373 = vand.u32 %v113, 4294901760
    %v374 = vsub.f32 %v113, %v373
    %v375 = vand.u32 %v374, 4294901760
    %376 = vmatpush.xpose.msra.mxu0 %v375
    %v377 = vand.u32 %v110, 4294901760
    %v378 = vsub.f32 %v110, %v377
    %v379 = vand.u32 %v378, 4294901760
    %380 = vmatpush.xpose.msra.mxu0 %v379
    %v381 = vand.u32 %v107, 4294901760
    %v382 = vsub.f32 %v107, %v381
    %v383 = vand.u32 %v382, 4294901760
    %384 = vmatpush.xpose.msra.mxu0 %v383
    %v385 = vand.u32 %v104, 4294901760
    %v386 = vsub.f32 %v104, %v385
    %v387 = vand.u32 %v386, 4294901760
    %388 = vmatpush.xpose.msra.mxu0 %v387
    %v389 = vand.u32 %v101, 4294901760
    %v390 = vsub.f32 %v101, %v389
    %v391 = vand.u32 %v390, 4294901760
    %392 = vmatpush.xpose.msra.mxu0 %v391
    %v393 = vand.u32 %v98, 4294901760
    %v394 = vsub.f32 %v98, %v393
    %v395 = vand.u32 %v394, 4294901760
    %396 = vmatpush.xpose.msra.mxu0 %v395
    %v397 = vand.u32 %v95, 4294901760
    %v398 = vsub.f32 %v95, %v397
    %v399 = vand.u32 %v398, 4294901760
    %400 = vmatpush.xpose.msra.mxu0 %v399
    %v401 = vand.u32 %v92, 4294901760
    %v402 = vsub.f32 %v92, %v401
    %v403 = vand.u32 %v402, 4294901760
    %404 = vmatpush.xpose.msra.mxu0 %v403
    %v405 = vand.u32 %v89, 4294901760
    %v406 = vsub.f32 %v89, %v405
    %v407 = vand.u32 %v406, 4294901760
    %408 = vmatpush.xpose.msra.mxu0 %v407
    %v409 = vand.u32 %v86, 4294901760
    %v410 = vsub.f32 %v86, %v409
    %v411 = vand.u32 %v410, 4294901760
    %412 = vmatpush.xpose.msra.mxu0 %v411
    %v413 = vand.u32 %v83, 4294901760
    %v414 = vsub.f32 %v83, %v413
    %v415 = vand.u32 %v414, 4294901760
    %416 = vmatpush.xpose.msra.mxu0 %v415
    %v417 = vand.u32 %v80, 4294901760
    %v418 = vsub.f32 %v80, %v417
    %v419 = vand.u32 %v418, 4294901760
    %420 = vmatpush.xpose.msra.mxu0 %v419
    %v421 = vand.u32 %v77, 4294901760
    %v422 = vsub.f32 %v77, %v421
    %v423 = vand.u32 %v422, 4294901760
    %424 = vmatpush.xpose.msra.mxu0 %v423
    %v425 = vand.u32 %v74, 4294901760
    %v426 = vsub.f32 %v74, %v425
    %v427 = vand.u32 %v426, 4294901760
    %428 = vmatpush.xpose.msra.mxu0 %v427
    %v429 = vand.u32 %v71, 4294901760
    %v430 = vsub.f32 %v71, %v429
    %v431 = vand.u32 %v430, 4294901760
    %432 = vmatpush.xpose.msra.mxu0 %v431
    %v433 = vand.u32 %v68, 4294901760
    %v434 = vsub.f32 %v68, %v433
    %v435 = vand.u32 %v434, 4294901760
    %436 = vmatpush.xpose.msra.mxu0 %v435
    %v437 = vand.u32 %v62, 4294901760
    %438 = vmatmul.f32.gmra.mxu0 %v437
    %v439 = vpop.f32.mrf.mxu0
    %v440 = vadd.f32 %v365, %v439
    %v441 = vand.u32 %v65, 4294901760
    %442 = vmatmul.f32.gmra.mxu0 %v441
    %v443 = vpop.f32.mrf.mxu0
    %v444 = vadd.f32 %v371, %v443
    %445 = vdwg.mxu0
    %v446 = vand.u32 %v113, 4294901760
    %447 = vmatpush.xpose.msra.mxu0 %v446
    %v448 = vand.u32 %v110, 4294901760
    %449 = vmatpush.xpose.msra.mxu0 %v448
    %v450 = vand.u32 %v107, 4294901760
    %451 = vmatpush.xpose.msra.mxu0 %v450
    %v452 = vand.u32 %v104, 4294901760
    %453 = vmatpush.xpose.msra.mxu0 %v452
    %v454 = vand.u32 %v101, 4294901760
    %455 = vmatpush.xpose.msra.mxu0 %v454
    %v456 = vand.u32 %v98, 4294901760
    %457 = vmatpush.xpose.msra.mxu0 %v456
    %v458 = vand.u32 %v95, 4294901760
    %459 = vmatpush.xpose.msra.mxu0 %v458
    %v460 = vand.u32 %v92, 4294901760
    %461 = vmatpush.xpose.msra.mxu0 %v460
    %v462 = vand.u32 %v89, 4294901760
    %463 = vmatpush.xpose.msra.mxu0 %v462
    %v464 = vand.u32 %v86, 4294901760
    %465 = vmatpush.xpose.msra.mxu0 %v464
    %v466 = vand.u32 %v83, 4294901760
    %467 = vmatpush.xpose.msra.mxu0 %v466
    %v468 = vand.u32 %v80, 4294901760
    %469 = vmatpush.xpose.msra.mxu0 %v468
    %v470 = vand.u32 %v77, 4294901760
    %471 = vmatpush.xpose.msra.mxu0 %v470
    %v472 = vand.u32 %v74, 4294901760
    %473 = vmatpush.xpose.msra.mxu0 %v472
    %v474 = vand.u32 %v71, 4294901760
    %475 = vmatpush.xpose.msra.mxu0 %v474
    %v476 = vand.u32 %v68, 4294901760
    %477 = vmatpush.xpose.msra.mxu0 %v476
    %v478 = vand.u32 %v62, 4294901760
    %479 = vmatmul.f32.gmra.mxu0 %v478
    %v480 = vpop.f32.mrf.mxu0
    %v481 = vadd.f32 %v440, %v480
    %v482 = vand.u32 %v65, 4294901760
    %483 = vmatmul.f32.gmra.mxu0 %v482
    %v484 = vpop.f32.mrf.mxu0
    %v485 = vadd.f32 %v444, %v484
    %486 = vdwg.mxu0
    %v487 = vmax.f32 %v481, %v485
    %v488 = vrot.slane %v487, 4
    %v489 = vmax.f32 %v487, %v488
    %v490 = vrot.slane %v489, 2
    %v491 = vmax.f32 %v489, %v490
    %v492 = vrot.slane %v491, 1
    %v493 = vmax.f32 %v491, %v492
    %v494 = vsub.f32 %v481, %v493
    %v495 = vsub.f32 %v485, %v493
    %v496 = vmul.f32 %v494, 1.442695
    %v497 = vpow.pop %v496
    %v498 = vmul.f32 %v495, 1.442695
    %v499 = vpow.pop %v498
    %v500 = vadd.f32 %v497, %v499
    %v501 = vrot.slane %v500, 4
    %v502 = vadd.f32 %v500, %v501
    %v503 = vrot.slane %v502, 2
    %v504 = vadd.f32 %v502, %v503
    %v505 = vrot.slane %v504, 1
    %v506 = vadd.f32 %v504, %v505
    %v507 = vrcp.pop %v506
    %v508 = vmul.f32 %v506, %v507
    %v509 = vsub.f32 1.0, %v508
    %v510 = vmul.f32 %v507, %v509
    %v511 = vadd.f32 %v507, %v510
    %vm512 = vweird.f32 %v506
    %vm513 = vweird.f32 %v507
    %vm514 = vmor %vm512, %vm513
    %v515 = vsel %vm514, %v507, %v511
    %v516 = vand.u32 2147483647, %v506
    %vm517 = vcmp.eq.f32.partialorder %v516, 8.507059e+37
    %v518 = vand.u32 %v506, 2147483648
    %v519 = vor.u32 1.1754944e-38, %v518
    %v520 = vsel %vm517, %v519, %v515
    %v521 = vmul.f32 %v497, %v520
    %v522 = vmul.f32 %v499, %v520
    %vm525 = vcmask 1040384
    %v526 = vrot.slane %v521, 7
    %v527 = vrot.slane %v522, 7
    %v528 = vsel %vm525, %v526, %v527
    %v531 = vsel %vm525, 0.0, %v526
    %532 = vst [vmem:[#allocation6] sm:$0xff] %v531
    %533 = vst [vmem:[#allocation6 + $0x8] sm:$0xff] %v528
    %vm534 = vcmask 130048
    %v536 = vsel %vm534, %v32, 0
    %v539 = vsel %vm534, %v33, 0
    %541 = vmatpush.msra.mxu0 0.0
    %542 = vmatpush.msra.mxu0 0.0
    %543 = vmatpush.msra.mxu0 0.0
    %544 = vmatpush.msra.mxu0 0.0
    %545 = vmatpush.msra.mxu0 0.0
    %546 = vmatpush.msra.mxu0 0.0
    %547 = vmatpush.msra.mxu0 0.0
    %548 = vmatpush.msra.mxu0 0.0
    %549 = vmatpush.msra.mxu0 0.0
    %550 = vmatpush.msra.mxu0 0.0
    %551 = vmatpush.msra.mxu0 0.0
    %552 = vmatpush.msra.mxu0 0.0
    %553 = vmatpush.msra.mxu0 0.0
    %554 = vmatpush.msra.mxu0 0.0
    %v555 = vand.u32 %v522, 4294901760
    %556 = vmatpush.msra.mxu0 %v555
    %v557 = vand.u32 %v521, 4294901760
    %558 = vmatpush.msra.mxu0 %v557
    %v559 = vand.u32 %v536, 4294901760
    %v560 = vsub.f32 %v536, %v559
    %v561 = vand.u32 %v560, 4294901760
    %v562 = vsub.f32 %v560, %v561
    %v563 = vand.u32 %v562, 4294901760
    %564 = vmatmul.f32.gmra.mxu0 %v563
    %v565 = vpop.f32.mrf.mxu0
    %v566 = vadd.f32 0.0, %v565
    %v567 = vand.u32 %v539, 4294901760
    %v568 = vsub.f32 %v539, %v567
    %v569 = vand.u32 %v568, 4294901760
    %v570 = vsub.f32 %v568, %v569
    %v571 = vand.u32 %v570, 4294901760
    %572 = vmatmul.f32.gmra.mxu0 %v571
    %v573 = vpop.f32.mrf.mxu0
    %v574 = vadd.f32 0.0, %v573
    %575 = vdwg.mxu0
    %576 = vmatpush.msra.mxu0 0.0
    %577 = vmatpush.msra.mxu0 0.0
    %578 = vmatpush.msra.mxu0 0.0
    %579 = vmatpush.msra.mxu0 0.0
    %580 = vmatpush.msra.mxu0 0.0
    %581 = vmatpush.msra.mxu0 0.0
    %582 = vmatpush.msra.mxu0 0.0
    %583 = vmatpush.msra.mxu0 0.0
    %584 = vmatpush.msra.mxu0 0.0
    %585 = vmatpush.msra.mxu0 0.0
    %586 = vmatpush.msra.mxu0 0.0
    %587 = vmatpush.msra.mxu0 0.0
    %588 = vmatpush.msra.mxu0 0.0
    %589 = vmatpush.msra.mxu0 0.0
    %v590 = vand.u32 %v522, 4294901760
    %v591 = vsub.f32 %v522, %v590
    %v592 = vand.u32 %v591, 4294901760
    %v593 = vsub.f32 %v591, %v592
    %v594 = vand.u32 %v593, 4294901760
    %595 = vmatpush.msra.mxu0 %v594
    %v596 = vand.u32 %v521, 4294901760
    %v597 = vsub.f32 %v521, %v596
    %v598 = vand.u32 %v597, 4294901760
    %v599 = vsub.f32 %v597, %v598
    %v600 = vand.u32 %v599, 4294901760
    %601 = vmatpush.msra.mxu0 %v600
    %v602 = vand.u32 %v536, 4294901760
    %603 = vmatmul.f32.gmra.mxu0 %v602
    %v604 = vpop.f32.mrf.mxu0
    %v605 = vadd.f32 %v566, %v604
    %v606 = vand.u32 %v539, 4294901760
    %607 = vmatmul.f32.gmra.mxu0 %v606
    %v608 = vpop.f32.mrf.mxu0
    %v609 = vadd.f32 %v574, %v608
    %610 = vdwg.mxu0
    %611 = vmatpush.msra.mxu0 0.0
    %612 = vmatpush.msra.mxu0 0.0
    %613 = vmatpush.msra.mxu0 0.0
    %614 = vmatpush.msra.mxu0 0.0
    %615 = vmatpush.msra.mxu0 0.0
    %616 = vmatpush.msra.mxu0 0.0
    %617 = vmatpush.msra.mxu0 0.0
    %618 = vmatpush.msra.mxu0 0.0
    %619 = vmatpush.msra.mxu0 0.0
    %620 = vmatpush.msra.mxu0 0.0
    %621 = vmatpush.msra.mxu0 0.0
    %622 = vmatpush.msra.mxu0 0.0
    %623 = vmatpush.msra.mxu0 0.0
    %624 = vmatpush.msra.mxu0 0.0
    %v625 = vand.u32 %v522, 4294901760
    %v626 = vsub.f32 %v522, %v625
    %627 = vmatpush.msra.mxu0 %v626
    %v628 = vand.u32 %v521, 4294901760
    %v629 = vsub.f32 %v521, %v628
    %630 = vmatpush.msra.mxu0 %v629
    %v631 = vand.u32 %v536, 4294901760
    %v632 = vsub.f32 %v536, %v631
    %633 = vmatmul.f32.gmra.mxu0 %v632
    %v634 = vpop.f32.mrf.mxu0
    %v635 = vadd.f32 %v605, %v634
    %v636 = vand.u32 %v539, 4294901760
    %v637 = vsub.f32 %v539, %v636
    %638 = vmatmul.f32.gmra.mxu0 %v637
    %v639 = vpop.f32.mrf.mxu0
    %v640 = vadd.f32 %v609, %v639
    %641 = vdwg.mxu0
    %642 = vmatpush.msra.mxu0 0.0
    %643 = vmatpush.msra.mxu0 0.0
    %644 = vmatpush.msra.mxu0 0.0
    %645 = vmatpush.msra.mxu0 0.0
    %646 = vmatpush.msra.mxu0 0.0
    %647 = vmatpush.msra.mxu0 0.0
    %648 = vmatpush.msra.mxu0 0.0
    %649 = vmatpush.msra.mxu0 0.0
    %650 = vmatpush.msra.mxu0 0.0
    %651 = vmatpush.msra.mxu0 0.0
    %652 = vmatpush.msra.mxu0 0.0
    %653 = vmatpush.msra.mxu0 0.0
    %654 = vmatpush.msra.mxu0 0.0
    %655 = vmatpush.msra.mxu0 0.0
    %v656 = vand.u32 %v522, 4294901760
    %657 = vmatpush.msra.mxu0 %v656
    %v658 = vand.u32 %v521, 4294901760
    %659 = vmatpush.msra.mxu0 %v658
    %v660 = vand.u32 %v536, 4294901760
    %v661 = vsub.f32 %v536, %v660
    %v662 = vand.u32 %v661, 4294901760
    %663 = vmatmul.f32.gmra.mxu0 %v662
    %v664 = vpop.f32.mrf.mxu0
    %v665 = vadd.f32 %v635, %v664
    %v666 = vand.u32 %v539, 4294901760
    %v667 = vsub.f32 %v539, %v666
    %v668 = vand.u32 %v667, 4294901760
    %669 = vmatmul.f32.gmra.mxu0 %v668
    %v670 = vpop.f32.mrf.mxu0
    %v671 = vadd.f32 %v640, %v670
    %672 = vdwg.mxu0
    %673 = vmatpush.msra.mxu0 0.0
    %674 = vmatpush.msra.mxu0 0.0
    %675 = vmatpush.msra.mxu0 0.0
    %676 = vmatpush.msra.mxu0 0.0
    %677 = vmatpush.msra.mxu0 0.0
    %678 = vmatpush.msra.mxu0 0.0
    %679 = vmatpush.msra.mxu0 0.0
    %680 = vmatpush.msra.mxu0 0.0
    %681 = vmatpush.msra.mxu0 0.0
    %682 = vmatpush.msra.mxu0 0.0
    %683 = vmatpush.msra.mxu0 0.0
    %684 = vmatpush.msra.mxu0 0.0
    %685 = vmatpush.msra.mxu0 0.0
    %686 = vmatpush.msra.mxu0 0.0
    %v687 = vand.u32 %v522, 4294901760
    %v688 = vsub.f32 %v522, %v687
    %v689 = vand.u32 %v688, 4294901760
    %690 = vmatpush.msra.mxu0 %v689
    %v691 = vand.u32 %v521, 4294901760
    %v692 = vsub.f32 %v521, %v691
    %v693 = vand.u32 %v692, 4294901760
    %694 = vmatpush.msra.mxu0 %v693
    %v695 = vand.u32 %v536, 4294901760
    %696 = vmatmul.f32.gmra.mxu0 %v695
    %v697 = vpop.f32.mrf.mxu0
    %v698 = vadd.f32 %v665, %v697
    %v699 = vand.u32 %v539, 4294901760
    %700 = vmatmul.f32.gmra.mxu0 %v699
    %v701 = vpop.f32.mrf.mxu0
    %v702 = vadd.f32 %v671, %v701
    %703 = vdwg.mxu0
    %704 = vmatpush.msra.mxu0 0.0
    %705 = vmatpush.msra.mxu0 0.0
    %706 = vmatpush.msra.mxu0 0.0
    %707 = vmatpush.msra.mxu0 0.0
    %708 = vmatpush.msra.mxu0 0.0
    %709 = vmatpush.msra.mxu0 0.0
    %710 = vmatpush.msra.mxu0 0.0
    %711 = vmatpush.msra.mxu0 0.0
    %712 = vmatpush.msra.mxu0 0.0
    %713 = vmatpush.msra.mxu0 0.0
    %714 = vmatpush.msra.mxu0 0.0
    %715 = vmatpush.msra.mxu0 0.0
    %716 = vmatpush.msra.mxu0 0.0
    %717 = vmatpush.msra.mxu0 0.0
    %v718 = vand.u32 %v522, 4294901760
    %719 = vmatpush.msra.mxu0 %v718
    %v720 = vand.u32 %v521, 4294901760
    %721 = vmatpush.msra.mxu0 %v720
    %v722 = vand.u32 %v536, 4294901760
    %723 = vmatmul.f32.gmra.mxu0 %v722
    %v724 = vpop.f32.mrf.mxu0
    %v725 = vadd.f32 %v698, %v724
    %v726 = vand.u32 %v539, 4294901760
    %727 = vmatmul.f32.gmra.mxu0 %v726
    %v728 = vpop.f32.mrf.mxu0
    %v729 = vadd.f32 %v702, %v728
    %730 = vdwg.mxu0
    %v731 = vmax.f32 %v725, 0.0
    %v732 = vmax.f32 %v729, 0.0
    %v733 = vmin.f32 %v731, 1.0
    %v734 = vmin.f32 %v732, 1.0
    %735 = vst [vmem:[#allocation4] sm:$0xff] %v733
    %736 = vst [vmem:[#allocation4 + $0x8] sm:$0xff] %v734
    %v737 = vsub.f32 1.0, %v733
    %v738 = vsub.f32 1.0, %v734
    %v739 = vmul.f32 %v737, %v737
    %v740 = vmul.f32 %v738, %v738
    %v741 = vmul.f32 %v733, %v737
    %v742 = vmul.f32 %v734, %v738
    %v743 = vadd.f32 %v741, %v741
    %v744 = vadd.f32 %v742, %v742
    %v745 = vmul.f32 %v733, %v733
    %v746 = vmul.f32 %v734, %v734
    %v747 = vmul.f32 %v737, %v739
    %v748 = vmul.f32 %v738, %v740
    %v749 = vmul.f32 %v733, %v739
    %v750 = vmul.f32 %v734, %v740
    %v751 = vmul.f32 %v737, %v743
    %v752 = vmul.f32 %v738, %v744
    %v753 = vadd.f32 %v749, %v751
    %v754 = vadd.f32 %v750, %v752
    %v755 = vmul.f32 %v733, %v743
    %v756 = vmul.f32 %v734, %v744
    %v757 = vmul.f32 %v737, %v745
    %v758 = vmul.f32 %v738, %v746
    %v759 = vadd.f32 %v755, %v757
    %v760 = vadd.f32 %v756, %v758
    %v761 = vmul.f32 %v733, %v745
    %v762 = vmul.f32 %v734, %v746
    %v763 = vmul.f32 %v737, %v747
    %v764 = vmul.f32 %v738, %v748
    %v765 = vmul.f32 %v733, %v747
    %v766 = vmul.f32 %v734, %v748
    %v767 = vmul.f32 %v737, %v753
    %v768 = vmul.f32 %v738, %v754
    %v769 = vadd.f32 %v765, %v767
    %v770 = vadd.f32 %v766, %v768
    %v771 = vmul.f32 %v733, %v753
    %v772 = vmul.f32 %v734, %v754
    %v773 = vmul.f32 %v737, %v759
    %v774 = vmul.f32 %v738, %v760
    %v775 = vadd.f32 %v771, %v773
    %v776 = vadd.f32 %v772, %v774
    %v777 = vmul.f32 %v733, %v759
    %v778 = vmul.f32 %v734, %v760
    %v779 = vmul.f32 %v737, %v761
    %v780 = vmul.f32 %v738, %v762
    %v781 = vadd.f32 %v777, %v779
    %v782 = vadd.f32 %v778, %v780
    %v783 = vmul.f32 %v733, %v761
    %v784 = vmul.f32 %v734, %v762
    %v785 = vmul.f32 %v737, %v763
    %v786 = vmul.f32 %v738, %v764
    %v787 = vmul.f32 %v733, %v763
    %v788 = vmul.f32 %v734, %v764
    %v789 = vmul.f32 %v737, %v769
    %v790 = vmul.f32 %v738, %v770
    %v791 = vadd.f32 %v787, %v789
    %v792 = vadd.f32 %v788, %v790
    %v793 = vmul.f32 %v733, %v769
    %v794 = vmul.f32 %v734, %v770
    %v795 = vmul.f32 %v737, %v775
    %v796 = vmul.f32 %v738, %v776
    %v797 = vadd.f32 %v793, %v795
    %v798 = vadd.f32 %v794, %v796
    %v799 = vmul.f32 %v733, %v775
    %v800 = vmul.f32 %v734, %v776
    %v801 = vmul.f32 %v737, %v781
    %v802 = vmul.f32 %v738, %v782
    %v803 = vadd.f32 %v799, %v801
    %v804 = vadd.f32 %v800, %v802
    %v805 = vmul.f32 %v733, %v781
    %v806 = vmul.f32 %v734, %v782
    %v807 = vmul.f32 %v737, %v783
    %v808 = vmul.f32 %v738, %v784
    %v809 = vadd.f32 %v805, %v807
    %v810 = vadd.f32 %v806, %v808
    %v811 = vmul.f32 %v733, %v783
    %v812 = vmul.f32 %v734, %v784
    %v813 = vmul.f32 %v737, %v785
    %v814 = vmul.f32 %v738, %v786
    %v815 = vmul.f32 %v733, %v785
    %v816 = vmul.f32 %v734, %v786
    %v817 = vmul.f32 %v737, %v791
    %v818 = vmul.f32 %v738, %v792
    %v819 = vadd.f32 %v815, %v817
    %v820 = vadd.f32 %v816, %v818
    %v821 = vmul.f32 %v733, %v791
    %v822 = vmul.f32 %v734, %v792
    %v823 = vmul.f32 %v737, %v797
    %v824 = vmul.f32 %v738, %v798
    %v825 = vadd.f32 %v821, %v823
    %v826 = vadd.f32 %v822, %v824
    %v827 = vmul.f32 %v733, %v797
    %v828 = vmul.f32 %v734, %v798
    %v829 = vmul.f32 %v737, %v803
    %v830 = vmul.f32 %v738, %v804
    %v831 = vadd.f32 %v827, %v829
    %v832 = vadd.f32 %v828, %v830
    %v833 = vmul.f32 %v733, %v803
    %v834 = vmul.f32 %v734, %v804
    %v835 = vmul.f32 %v737, %v809
    %v836 = vmul.f32 %v738, %v810
    %v837 = vadd.f32 %v833, %v835
    %v838 = vadd.f32 %v834, %v836
    %v839 = vmul.f32 %v733, %v809
    %v840 = vmul.f32 %v734, %v810
    %v841 = vmul.f32 %v737, %v811
    %v842 = vmul.f32 %v738, %v812
    %v843 = vadd.f32 %v839, %v841
    %v844 = vadd.f32 %v840, %v842
    %v845 = vmul.f32 %v733, %v811
    %v846 = vmul.f32 %v734, %v812
    %v847 = vld [vmem:[%s2] sm:$0xff]
    %v848 = vld [vmem:[%s1] sm:$0xff]
    %v849 = vld [vmem:[%s1 + $0x8] sm:$0xff]
    %v850 = vmul.f32 %v737, %v813
    %v851 = vmul.f32 %v738, %v814
    %v852 = vperm.slane %v847, 0
    %v853 = vmul.f32 %v852, %v850
    %v854 = vmul.f32 %v852, %v851
    %v855 = vadd.f32 %v853, 0.0
    %v856 = vadd.f32 %v854, 0.0
    %v857 = vperm.slane %v848, 0
    %v858 = vmul.f32 %v857, %v853
    %v859 = vmul.f32 %v857, %v854
    %v860 = vadd.f32 %v858, 0.0
    %v861 = vadd.f32 %v859, 0.0
    %v862 = vperm.slane %v849, 0
    %v863 = vmul.f32 %v862, %v853
    %v864 = vmul.f32 %v862, %v854
    %v865 = vadd.f32 %v863, 0.0
    %v866 = vadd.f32 %v864, 0.0
    %v867 = vmul.f32 %v733, %v813
    %v868 = vmul.f32 %v734, %v814
    %v869 = vmul.f32 %v737, %v819
    %v870 = vmul.f32 %v738, %v820
    %v871 = vadd.f32 %v867, %v869
    %v872 = vadd.f32 %v868, %v870
    %v873 = vperm.slane %v847, 1
    %v874 = vmul.f32 %v873, %v871
    %v875 = vmul.f32 %v873, %v872
    %v876 = vadd.f32 %v855, %v874
    %v877 = vadd.f32 %v856, %v875
    %v878 = vperm.slane %v848, 1
    %v879 = vmul.f32 %v878, %v874
    %v880 = vmul.f32 %v878, %v875
    %v881 = vadd.f32 %v860, %v879
    %v882 = vadd.f32 %v861, %v880
    %v883 = vperm.slane %v849, 1
    %v884 = vmul.f32 %v883, %v874
    %v885 = vmul.f32 %v883, %v875
    %v886 = vadd.f32 %v865, %v884
    %v887 = vadd.f32 %v866, %v885
    %v888 = vmul.f32 %v733, %v819
    %v889 = vmul.f32 %v734, %v820
    %v890 = vmul.f32 %v737, %v825
    %v891 = vmul.f32 %v738, %v826
    %v892 = vadd.f32 %v888, %v890
    %v893 = vadd.f32 %v889, %v891
    %v894 = vperm.slane %v847, 2
    %v895 = vmul.f32 %v894, %v892
    %v896 = vmul.f32 %v894, %v893
    %v897 = vadd.f32 %v876, %v895
    %v898 = vadd.f32 %v877, %v896
    %v899 = vperm.slane %v848, 2
    %v900 = vmul.f32 %v899, %v895
    %v901 = vmul.f32 %v899, %v896
    %v902 = vadd.f32 %v881, %v900
    %v903 = vadd.f32 %v882, %v901
    %v904 = vperm.slane %v849, 2
    %v905 = vmul.f32 %v904, %v895
    %v906 = vmul.f32 %v904, %v896
    %v907 = vadd.f32 %v886, %v905
    %v908 = vadd.f32 %v887, %v906
    %v909 = vmul.f32 %v733, %v825
    %v910 = vmul.f32 %v734, %v826
    %v911 = vmul.f32 %v737, %v831
    %v912 = vmul.f32 %v738, %v832
    %v913 = vadd.f32 %v909, %v911
    %v914 = vadd.f32 %v910, %v912
    %v915 = vperm.slane %v847, 3
    %v916 = vmul.f32 %v915, %v913
    %v917 = vmul.f32 %v915, %v914
    %v918 = vadd.f32 %v897, %v916
    %v919 = vadd.f32 %v898, %v917
    %v920 = vperm.slane %v848, 3
    %v921 = vmul.f32 %v920, %v916
    %v922 = vmul.f32 %v920, %v917
    %v923 = vadd.f32 %v902, %v921
    %v924 = vadd.f32 %v903, %v922
    %v925 = vperm.slane %v849, 3
    %v926 = vmul.f32 %v925, %v916
    %v927 = vmul.f32 %v925, %v917
    %v928 = vadd.f32 %v907, %v926
    %v929 = vadd.f32 %v908, %v927
    %v930 = vmul.f32 %v733, %v831
    %v931 = vmul.f32 %v734, %v832
    %v932 = vmul.f32 %v737, %v837
    %v933 = vmul.f32 %v738, %v838
    %v934 = vadd.f32 %v930, %v932
    %v935 = vadd.f32 %v931, %v933
    %v936 = vperm.slane %v847, 4
    %v937 = vmul.f32 %v936, %v934
    %v938 = vmul.f32 %v936, %v935
    %v939 = vadd.f32 %v918, %v937
    %v940 = vadd.f32 %v919, %v938
    %v941 = vperm.slane %v848, 4
    %v942 = vmul.f32 %v941, %v937
    %v943 = vmul.f32 %v941, %v938
    %v944 = vadd.f32 %v923, %v942
    %v945 = vadd.f32 %v924, %v943
    %v946 = vperm.slane %v849, 4
    %v947 = vmul.f32 %v946, %v937
    %v948 = vmul.f32 %v946, %v938
    %v949 = vadd.f32 %v928, %v947
    %v950 = vadd.f32 %v929, %v948
    %v951 = vmul.f32 %v733, %v837
    %v952 = vmul.f32 %v734, %v838
    %v953 = vmul.f32 %v737, %v843
    %v954 = vmul.f32 %v738, %v844
    %v955 = vadd.f32 %v951, %v953
    %v956 = vadd.f32 %v952, %v954
    %v957 = vperm.slane %v847, 5
    %v958 = vmul.f32 %v957, %v955
    %v959 = vmul.f32 %v957, %v956
    %v960 = vadd.f32 %v939, %v958
    %v961 = vadd.f32 %v940, %v959
    %v962 = vperm.slane %v848, 5
    %v963 = vmul.f32 %v962, %v958
    %v964 = vmul.f32 %v962, %v959
    %v965 = vadd.f32 %v944, %v963
    %v966 = vadd.f32 %v945, %v964
    %v967 = vperm.slane %v849, 5
    %v968 = vmul.f32 %v967, %v958
    %v969 = vmul.f32 %v967, %v959
    %v970 = vadd.f32 %v949, %v968
    %v971 = vadd.f32 %v950, %v969
    %v972 = vmul.f32 %v733, %v843
    %v973 = vmul.f32 %v734, %v844
    %v974 = vmul.f32 %v737, %v845
    %v975 = vmul.f32 %v738, %v846
    %v976 = vadd.f32 %v972, %v974
    %v977 = vadd.f32 %v973, %v975
    %v978 = vperm.slane %v847, 6
    %v979 = vmul.f32 %v978, %v976
    %v980 = vmul.f32 %v978, %v977
    %v981 = vadd.f32 %v960, %v979
    %v982 = vadd.f32 %v961, %v980
    %v983 = vperm.slane %v848, 6
    %v984 = vmul.f32 %v983, %v979
    %v985 = vmul.f32 %v983, %v980
    %v986 = vadd.f32 %v965, %v984
    %v987 = vadd.f32 %v966, %v985
    %v988 = vperm.slane %v849, 6
    %v989 = vmul.f32 %v988, %v979
    %v990 = vmul.f32 %v988, %v980
    %v991 = vadd.f32 %v970, %v989
    %v992 = vadd.f32 %v971, %v990
    %v993 = vmul.f32 %v733, %v845
    %v994 = vmul.f32 %v734, %v846
    %v995 = vperm.slane %v847, 7
    %v996 = vmul.f32 %v995, %v993
    %v997 = vmul.f32 %v995, %v994
    %v998 = vadd.f32 %v981, %v996
    %v999 = vadd.f32 %v982, %v997
    %v1000 = vperm.slane %v848, 7
    %v1001 = vmul.f32 %v1000, %v996
    %v1002 = vmul.f32 %v1000, %v997
    %v1003 = vadd.f32 %v986, %v1001
    %v1004 = vadd.f32 %v987, %v1002
    %v1005 = vperm.slane %v849, 7
    %v1006 = vmul.f32 %v1005, %v996
    %v1007 = vmul.f32 %v1005, %v997
    %v1008 = vadd.f32 %v991, %v1006
    %v1009 = vadd.f32 %v992, %v1007
    %v1010 = vrcp.pop %v998
    %v1011 = vrcp.pop %v999
    %v1012 = vmul.f32 %v998, %v1010
    %v1013 = vmul.f32 %v999, %v1011
    %v1014 = vsub.f32 2.0, %v1012
    %v1015 = vsub.f32 2.0, %v1013
    %v1016 = vmul.f32 %v1010, %v1014
    %v1017 = vmul.f32 %v1011, %v1015
    %v1018 = vmul.f32 %v1003, %v1016
    %v1019 = vmul.f32 %v1004, %v1017
    %1020 = vst [vmem:[#allocation2] sm:$0xff] %v1018
    %1021 = vst [vmem:[#allocation2 + $0x8] sm:$0xff] %v1019
    %v1022 = vmul.f32 %v1008, %v1016
    %v1023 = vmul.f32 %v1009, %v1017
    %s1024 = scalar_lea.vmem [#allocation2], 16
    %1025 = vst [vmem:[%s1024] sm:$0xff] %v1022
    %1026 = vst [vmem:[%s1024 + $0x8] sm:$0xff] %v1023
    // Predicated region
    $region26: #{tpu_custom_call.1} parent=1 // pred_check
      _
    $region27: #{tpu_custom_call.1} parent=1 // pred_check_branch
      %1028 = sbr.rel (0) target = $region29
    $region28: #{tpu_custom_call.1} parent=1 // pred_region
      %1030 = vsyncadd [#allocation3], 0
      %s1031 = sshll.u32 [#allocation2], 4
      %s1032 = int_to_ptr.vmem [resolvable:$true] %s1031
      %s1033 = sshll.u32 %s6, 4
      %s1034 = int_to_ptr.hbm [resolvable:$true] %s1033
      %1039 = dma.vmem_to_hbm [thread:$0]  %s1032, 512, %s1034, [#allocation3], 128, 128, 8
    $region29: #{tpu_custom_call.1} parent=1 // pred_fallthru
      _
    // Predicated region
    $region30: #{tpu_custom_call.1} parent=1 // pred_check
      _
    $region31: #{tpu_custom_call.1} parent=1 // pred_check_branch
      %1041 = sbr.rel (0) target = $region33
    $region32: #{tpu_custom_call.1} parent=1 // pred_region
      %1043 = vsyncadd [#allocation5], 0
      %s1044 = sshll.u32 [#allocation4], 4
      %s1045 = int_to_ptr.vmem [resolvable:$true] %s1044
      %s1046 = sshll.u32 %s7, 4
      %s1047 = int_to_ptr.hbm [resolvable:$true] %s1046
      %1052 = dma.vmem_to_hbm [thread:$0]  %s1045, 256, %s1047, [#allocation5], 128, 128, 8
    $region33: #{tpu_custom_call.1} parent=1 // pred_fallthru
      _
    // Predicated region
    $region34: #{tpu_custom_call.1} parent=1 // pred_check
      _
    $region35: #{tpu_custom_call.1} parent=1 // pred_check_branch
      %1054 = sbr.rel (0) target = $region37
    $region36: #{tpu_custom_call.1} parent=1 // pred_region
      %1056 = vsyncadd [#allocation5], 0
      %s1057 = sshll.u32 [#allocation6], 4
      %s1058 = int_to_ptr.vmem [resolvable:$true] %s1057
      %s1059 = sshll.u32 %s8, 4
      %s1060 = int_to_ptr.hbm [resolvable:$true] %s1059
      %1065 = dma.vmem_to_hbm [thread:$0]  %s1058, 256, %s1060, [#allocation5], 128, 128, 8
    $region37: #{tpu_custom_call.1} parent=1 // pred_fallthru
      _
    // Predicated region
    $region38: #{tpu_custom_call.1} parent=1 // pred_check
      _
    $region39: #{tpu_custom_call.1} parent=1 // pred_check_branch
      %1067 = sbr.rel (0) target = $region41
    $region40: #{tpu_custom_call.1} parent=1 // pred_region
      %1069 = dma.done [#allocation3], 512
    $region41: #{tpu_custom_call.1} parent=1 // pred_fallthru
      _
    // Predicated region
    $region42: #{tpu_custom_call.1} parent=1 // pred_check
      _
    $region43: #{tpu_custom_call.1} parent=1 // pred_check_branch
      %1071 = sbr.rel (0) target = $region45
    $region44: #{tpu_custom_call.1} parent=1 // pred_region
      %1073 = dma.done [#allocation5], 256
    $region45: #{tpu_custom_call.1} parent=1 // pred_fallthru
      _
    // Predicated region
    $region46: #{tpu_custom_call.1} parent=1 // pred_check
      _
    $region47: #{tpu_custom_call.1} parent=1 // pred_check_branch
      %1075 = sbr.rel (0) target = $region49
    $region48: #{tpu_custom_call.1} parent=1 // pred_region
      %1077 = dma.done [#allocation5], 256
    $region49: #{tpu_custom_call.1} parent=1 // pred_fallthru
      _
    %1078 = vsyncpa [#allocation3], 1
    %1079 = vsyncpa [#allocation5], 1

</llo_original>
